<compile_context>
chip_gen: v7x
topology: tpu7x:2x2x1
jax: 0.10.0
libtpu: 0.0.40
codegen_flags: <defaults>
</compile_context>

<pallas_src>
import functools

import jax
import jax.numpy as jnp
from jax.experimental import pallas as pl
from jax.experimental.pallas import tpu as pltpu

# Matmul operand dtype. jnp.bfloat16 halves operand DMA bytes and doubles MXU
# rate on v6e/v7x (accumulation stays f32 via preferred_element_type); kept
# f32 here so the result matches the f32 PyTorch module within 1e-4.
MATMUL_DTYPE = jnp.float32


# ----------------------------- Pallas kernel --------------------------------


def _inception_kernel(hw_ref, x_ref, w1_ref, b1_ref, w3_ref, b3_ref,
                      w5_ref, b5_ref, wp_ref, bp_ref, o_ref,
                      *, H, W, out_1x1, reduce_3x3, reduce_5x5):
    """Fused inception forward for one batch element.

    hw_ref : (2, H*W) int32   row 0 = h index, row 1 = w index per flat pos
    x_ref  : (1, Cin, H*W)    input, flattened spatial on the lane axis
    w1_ref : (o1+r3+r5, Cin)  fused 1x1 weights    b1_ref: (o1+r3+r5, 1)
    w3_ref : (o3, 9*r3)       im2col 3x3 weights   b3_ref: (o3, 1)
    w5_ref : (o5, 25*r5)      im2col 5x5 weights   b5_ref: (o5, 1)
    wp_ref : (op, Cin)        pool-branch 1x1      bp_ref: (op, 1)
    o_ref  : (1, o1+o3+o5+op, H*W)   lane-dense NCHW output
    """
    HW = H * W
    h_idx = hw_ref[0:1, :]                               # (1, HW) int32
    w_idx = hw_ref[1:2, :]                               # (1, HW) int32
    x = x_ref[0]                                         # (Cin, HW) f32

    def mm(w, p):                                        # MXU, f32 accumulate
        return jnp.dot(w.astype(MATMUL_DTYPE), p.astype(MATMUL_DTYPE),
                       preferred_element_type=jnp.float32)

    def tap(v, dh, dw, fill):
        """v shifted by (dh, dw) on the (H, W) grid; `fill` outside the image."""
        s = dh * W + dw
        r = v if s == 0 else pltpu.roll(v, shift=(-s) % HW, axis=1)
        if dh == 0 and dw == 0:
            return r
        mask = ((h_idx >= -dh) & (h_idx < H - dh) &
                (w_idx >= -dw) & (w_idx < W - dw))
        return jnp.where(mask, r, fill)

    # ---- three 1x1 convs over the shared input x: one MXU pass -------------
    cat1 = jnp.maximum(mm(w1_ref[...], x) + b1_ref[...], 0.0)
    out1 = cat1[:out_1x1]
    red3 = cat1[out_1x1:out_1x1 + reduce_3x3]
    red5 = cat1[out_1x1 + reduce_3x3:out_1x1 + reduce_3x3 + reduce_5x5]

    # ---- KxK 'same' conv as a single im2col matmul --------------------------
    def conv_relu(v, w_r, b_r, K):
        p = K // 2
        patch = jnp.concatenate(
            [tap(v, kh - p, kw - p, 0.0) for kh in range(K) for kw in range(K)],
            axis=0)                                       # (K*K*C, HW)
        return jnp.maximum(mm(w_r[...], patch) + b_r[...], 0.0)

    out3 = conv_relu(red3, w3_ref, b3_ref, 3)             # (o3, HW)
    out5 = conv_relu(red5, w5_ref, b5_ref, 5)             # (o5, HW)

    # ---- 3x3 / s1 / p1 max-pool on x, then 1x1 conv + relu ------------------
    pooled = x                                            # center tap
    for kh in range(3):
        for kw in range(3):
            if kh == 1 and kw == 1:
                continue
            pooled = jnp.maximum(pooled, tap(x, kh - 1, kw - 1, -jnp.inf))
    outp = jnp.maximum(mm(wp_ref[...], pooled) + bp_ref[...], 0.0)

    # ---- lane-dense NCHW write: (Ctot, HW) with HW on the lane axis ---------
    o_ref[0] = jnp.concatenate([out1, out3, out5, outp], axis=0)


# ------------------------------ JAX wrapper ----------------------------------


def _flatten_weight(w_hwio):
    """(K, K, Cin, Cout) HWIO -> (Cout, K*K*Cin), matching the im2col order."""
    K, _, ci, co = w_hwio.shape
    return jnp.transpose(w_hwio.reshape(K * K * ci, co)).astype(jnp.float32)


def inception_forward(x_nchw, params):
    """Matches PyTorch InceptionModule.forward. Input/output are NCHW."""
    N, Cin, H, W = x_nchw.shape
    HW = H * W
    x = x_nchw.reshape(N, Cin, HW).astype(jnp.float32)    # free reshape

    w1, b1 = params["conv1x1"]
    w3r, b3r = params["conv3x3_reduce"]
    w3, b3 = params["conv3x3"]
    w5r, b5r = params["conv5x5_reduce"]
    w5, b5 = params["conv5x5"]
    wp, bp = params["conv_pool"]

    o1, r3, o3 = w1.shape[-1], w3r.shape[-1], w3.shape[-1]
    r5, o5, op = w5r.shape[-1], w5.shape[-1], wp.shape[-1]
    ctot = o1 + o3 + o5 + op

    # Fused 1x1 weights for the three branches that share input x.
    w1cat = jnp.concatenate(
        [_flatten_weight(w1), _flatten_weight(w3r), _flatten_weight(w5r)], 0)
    b1cat = jnp.concatenate([b1, b3r, b5r]).reshape(-1, 1).astype(jnp.float32)
    w3f, b3f = _flatten_weight(w3), b3.reshape(-1, 1).astype(jnp.float32)
    w5f, b5f = _flatten_weight(w5), b5.reshape(-1, 1).astype(jnp.float32)
    wpf, bpf = _flatten_weight(wp), bp.reshape(-1, 1).astype(jnp.float32)

    # (h, w) index of every flattened spatial position, for the border masks.
    hw_idx = jnp.stack(
        [jnp.repeat(jnp.arange(H, dtype=jnp.int32), W),
         jnp.tile(jnp.arange(W, dtype=jnp.int32), H)], axis=0)   # (2, HW)

    kernel = functools.partial(_inception_kernel, H=H, W=W, out_1x1=o1,
                               reduce_3x3=r3, reduce_5x5=r5)
    const = lambda n: (0, 0)

    out = pl.pallas_call(
        kernel,
        out_shape=jax.ShapeDtypeStruct((N, ctot, HW), jnp.float32),
        grid=(N,),
        in_specs=[
            pl.BlockSpec((2, HW), const),                        # hw_idx
            pl.BlockSpec((1, Cin, HW), lambda n: (n, 0, 0)),     # x
            pl.BlockSpec(w1cat.shape, const),
            pl.BlockSpec(b1cat.shape, const),
            pl.BlockSpec(w3f.shape, const),
            pl.BlockSpec(b3f.shape, const),
            pl.BlockSpec(w5f.shape, const),
            pl.BlockSpec(b5f.shape, const),
            pl.BlockSpec(wpf.shape, const),
            pl.BlockSpec(bpf.shape, const),
        ],
        out_specs=pl.BlockSpec((1, ctot, HW), lambda n: (n, 0, 0)),
        compiler_params=pltpu.CompilerParams(
            dimension_semantics=("parallel",)),
    )(hw_idx, x, w1cat, b1cat, w3f, b3f, w5f, b5f, wpf, bpf)

    return out.reshape(N, ctot, H, W)                     # free reshape, NCHW


# ------------------------------ Param init -----------------------------------


def init_inception_params(key, in_channels, out_1x1, reduce_3x3, out_3x3,
                          reduce_5x5, out_5x5, out_pool):
    """Deterministic synthetic params. Weights stored HWIO, biases (Cout,)."""
    def mk(key, k, cin, cout):
        kw, kb = jax.random.split(key)
        w = 0.1 * jax.random.normal(kw, (k, k, cin, cout), jnp.float32)
        b = 0.1 * jax.random.normal(kb, (cout,), jnp.float32)
        return w, b

    keys = jax.random.split(key, 6)
    return {
        "conv1x1": mk(keys[0], 1, in_channels, out_1x1),
        "conv3x3_reduce": mk(keys[1], 1, in_channels, reduce_3x3),
        "conv3x3": mk(keys[2], 3, reduce_3x3, out_3x3),
        "conv5x5_reduce": mk(keys[3], 1, in_channels, reduce_5x5),
        "conv5x5": mk(keys[4], 5, reduce_5x5, out_5x5),
        "conv_pool": mk(keys[5], 1, in_channels, out_pool),
    }


# ------------------------------ Reference (pure JAX) --------------------------


def _ref_conv_relu(x, w, b, pad):
    y = jax.lax.conv_general_dilated(
        x, w, window_strides=(1, 1),
        padding=[(pad, pad), (pad, pad)],
        dimension_numbers=("NHWC", "HWIO", "NHWC"))
    return jax.nn.relu(y + b.reshape(1, 1, 1, -1))


def _ref_maxpool(x):
    return jax.lax.reduce_window(
        x, -jnp.inf, jax.lax.max,
        window_dimensions=(1, 3, 3, 1), window_strides=(1, 1, 1, 1),
        padding=[(0, 0), (1, 1), (1, 1), (0, 0)])


def inception_forward_ref(x_nchw, params):
    x = jnp.transpose(x_nchw, (0, 2, 3, 1)).astype(jnp.float32)
    o1 = _ref_conv_relu(x, *params["conv1x1"], 0)
    o3 = _ref_conv_relu(_ref_conv_relu(x, *params["conv3x3_reduce"], 0),
                        *params["conv3x3"], 1)
    o5 = _ref_conv_relu(_ref_conv_relu(x, *params["conv5x5_reduce"], 0),
                        *params["conv5x5"], 2)
    op = _ref_conv_relu(_ref_maxpool(x), *params["conv_pool"], 0)
    out = jnp.concatenate([o1, o3, o5, op], axis=-1)
    return jnp.transpose(out, (0, 3, 1, 2))


# ------------------------------------ main ------------------------------------


if __name__ == "__main__":
    key = jax.random.PRNGKey(0)
    k_x, k_p = jax.random.split(key)

    # Small shapes: batch=2, in_channels=4, spatial 16x16
    N, Cin, H, W = 2, 4, 16, 16
    out_1x1, reduce_3x3, out_3x3 = 8, 4, 8
    reduce_5x5, out_5x5, out_pool = 4, 8, 8

    x = jax.random.normal(k_x, (N, Cin, H, W), jnp.float32)
    params = init_inception_params(k_p, Cin, out_1x1, reduce_3x3, out_3x3,
                                   reduce_5x5, out_5x5, out_pool)

    fwd = jax.jit(inception_forward)
    out = jax.block_until_ready(fwd(x, params))

    expected_c = out_1x1 + out_3x3 + out_5x5 + out_pool
    assert out.shape == (N, expected_c, H, W), out.shape

    ref = jax.block_until_ready(inception_forward_ref(x, params))
    assert jnp.allclose(out, ref, atol=1e-4, rtol=1e-4), (
        float(jnp.max(jnp.abs(out - ref))))

    print("KERNEL_OK")
</pallas_src>

<mosaic_0001>
module attributes {stable_mosaic.version = 11 : i64} {
  func.func @_inception_kernel(%arg0: i32, %arg1: memref<2x256xi32, #tpu.memory_space<vmem>>, %arg2: memref<1x4x256xf32, #tpu.memory_space<vmem>>, %arg3: memref<16x4xf32, #tpu.memory_space<vmem>>, %arg4: memref<16x1xf32, #tpu.memory_space<vmem>>, %arg5: memref<8x36xf32, #tpu.memory_space<vmem>>, %arg6: memref<8x1xf32, #tpu.memory_space<vmem>>, %arg7: memref<8x100xf32, #tpu.memory_space<vmem>>, %arg8: memref<8x1xf32, #tpu.memory_space<vmem>>, %arg9: memref<8x4xf32, #tpu.memory_space<vmem>>, %arg10: memref<8x1xf32, #tpu.memory_space<vmem>>, %arg11: memref<1x32x256xf32, #tpu.memory_space<vmem>>) attributes {dimension_semantics = [#tpu.dimension_semantics<parallel>], iteration_bounds = array<i64: 2>, scalar_prefetch = 0 : i64, scratch_operands = 0 : i64, tpu.core_type = #tpu.core_type<tc>, window_params = [{pipeline_mode = #tpu.pipeline_mode<synchronous>, transform_indices = @transform_0, window_bounds = array<i64: 2, 256>}, {transform_indices = @transform_1, window_bounds = array<i64: 1, 4, 256>}, {pipeline_mode = #tpu.pipeline_mode<synchronous>, transform_indices = @transform_2, window_bounds = array<i64: 16, 4>}, {pipeline_mode = #tpu.pipeline_mode<synchronous>, transform_indices = @transform_3, window_bounds = array<i64: 16, 1>}, {pipeline_mode = #tpu.pipeline_mode<synchronous>, transform_indices = @transform_4, window_bounds = array<i64: 8, 36>}, {pipeline_mode = #tpu.pipeline_mode<synchronous>, transform_indices = @transform_5, window_bounds = array<i64: 8, 1>}, {pipeline_mode = #tpu.pipeline_mode<synchronous>, transform_indices = @transform_6, window_bounds = array<i64: 8, 100>}, {pipeline_mode = #tpu.pipeline_mode<synchronous>, transform_indices = @transform_7, window_bounds = array<i64: 8, 1>}, {pipeline_mode = #tpu.pipeline_mode<synchronous>, transform_indices = @transform_8, window_bounds = array<i64: 8, 4>}, {pipeline_mode = #tpu.pipeline_mode<synchronous>, transform_indices = @transform_9, window_bounds = array<i64: 8, 1>}, {transform_indices = @transform_10, window_bounds = array<i64: 1, 32, 256>}]} {
    %c0 = arith.constant 0 : index
    %c0_0 = arith.constant 0 : index
    %0 = vector.load %arg1[%c0, %c0_0] : memref<2x256xi32, #tpu.memory_space<vmem>>, vector<1x256xi32>
    %c1 = arith.constant 1 : index
    %c0_1 = arith.constant 0 : index
    %1 = vector.load %arg1[%c1, %c0_1] : memref<2x256xi32, #tpu.memory_space<vmem>>, vector<1x256xi32>
    %c0_2 = arith.constant 0 : index
    %c0_3 = arith.constant 0 : index
    %c0_4 = arith.constant 0 : index
    %2 = vector.load %arg2[%c0_2, %c0_3, %c0_4] : memref<1x4x256xf32, #tpu.memory_space<vmem>>, vector<1x4x256xf32>
    %3 = vector.shape_cast %2 : vector<1x4x256xf32> to vector<4x256xf32>
    %c0_5 = arith.constant 0 : index
    %c0_6 = arith.constant 0 : index
    %4 = vector.load %arg3[%c0_5, %c0_6] : memref<16x4xf32, #tpu.memory_space<vmem>>, vector<16x4xf32>
    %cst = arith.constant dense<0.000000e+00> : vector<16x256xf32>
    %5 = tpu.matmul %4, %3, %cst {dimension_numbers = #tpu.dot_dimension_numbers<[1], [0], [0], [1], [0, 0, 1, 1], [], []>} : vector<16x4xf32>, vector<4x256xf32>, vector<16x256xf32> -> vector<16x256xf32>
    %c0_7 = arith.constant 0 : index
    %c0_8 = arith.constant 0 : index
    %6 = vector.load %arg4[%c0_7, %c0_8] : memref<16x1xf32, #tpu.memory_space<vmem>>, vector<16x1xf32>
    %7 = vector.broadcast %6 : vector<16x1xf32> to vector<16x256xf32>
    %8 = arith.addf %5, %7 : vector<16x256xf32>
    %cst_9 = arith.constant 0.000000e+00 : f32
    %9 = vector.broadcast %cst_9 : f32 to vector<16x256xf32>
    %10 = arith.maximumf %8, %9 : vector<16x256xf32>
    %11 = vector.extract_strided_slice %10 {offsets = [0, 0], sizes = [8, 256], strides = [1, 1]} : vector<16x256xf32> to vector<8x256xf32>
    %12 = vector.extract_strided_slice %10 {offsets = [8, 0], sizes = [4, 256], strides = [1, 1]} : vector<16x256xf32> to vector<4x256xf32>
    %13 = vector.extract_strided_slice %10 {offsets = [12, 0], sizes = [4, 256], strides = [1, 1]} : vector<16x256xf32> to vector<4x256xf32>
    %c17_i32 = arith.constant 17 : i32
    %14 = tpu.dynamic_rotate %12 by %c17_i32 dim 1 : vector<4x256xf32>, i32 -> vector<4x256xf32>
    %c1_i32 = arith.constant 1 : i32
    %15 = vector.broadcast %c1_i32 : i32 to vector<1x256xi32>
    %16 = arith.cmpi sge, %0, %15 : vector<1x256xi32>
    %c17_i32_10 = arith.constant 17 : i32
    %17 = vector.broadcast %c17_i32_10 : i32 to vector<1x256xi32>
    %18 = arith.cmpi slt, %0, %17 : vector<1x256xi32>
    %19 = arith.andi %16, %18 : vector<1x256xi1>
    %c1_i32_11 = arith.constant 1 : i32
    %20 = vector.broadcast %c1_i32_11 : i32 to vector<1x256xi32>
    %21 = arith.cmpi sge, %1, %20 : vector<1x256xi32>
    %22 = arith.andi %19, %21 : vector<1x256xi1>
    %c17_i32_12 = arith.constant 17 : i32
    %23 = vector.broadcast %c17_i32_12 : i32 to vector<1x256xi32>
    %24 = arith.cmpi slt, %1, %23 : vector<1x256xi32>
    %25 = arith.andi %22, %24 : vector<1x256xi1>
    %cst_13 = arith.constant 0.000000e+00 : f32
    %26 = vector.shape_cast %25 : vector<1x256xi1> to vector<1x256xi1>
    %27 = vector.broadcast %26 : vector<1x256xi1> to vector<4x256xi1>
    %28 = vector.broadcast %cst_13 : f32 to vector<4x256xf32>
    %29 = arith.select %27, %14, %28 : vector<4x256xi1>, vector<4x256xf32>
    %c16_i32 = arith.constant 16 : i32
    %30 = tpu.dynamic_rotate %12 by %c16_i32 dim 1 : vector<4x256xf32>, i32 -> vector<4x256xf32>
    %c1_i32_14 = arith.constant 1 : i32
    %31 = vector.broadcast %c1_i32_14 : i32 to vector<1x256xi32>
    %32 = arith.cmpi sge, %0, %31 : vector<1x256xi32>
    %c17_i32_15 = arith.constant 17 : i32
    %33 = vector.broadcast %c17_i32_15 : i32 to vector<1x256xi32>
    %34 = arith.cmpi slt, %0, %33 : vector<1x256xi32>
    %35 = arith.andi %32, %34 : vector<1x256xi1>
    %c0_i32 = arith.constant 0 : i32
    %36 = vector.broadcast %c0_i32 : i32 to vector<1x256xi32>
    %37 = arith.cmpi sge, %1, %36 : vector<1x256xi32>
    %38 = arith.andi %35, %37 : vector<1x256xi1>
    %c16_i32_16 = arith.constant 16 : i32
    %39 = vector.broadcast %c16_i32_16 : i32 to vector<1x256xi32>
    %40 = arith.cmpi slt, %1, %39 : vector<1x256xi32>
    %41 = arith.andi %38, %40 : vector<1x256xi1>
    %cst_17 = arith.constant 0.000000e+00 : f32
    %42 = vector.shape_cast %41 : vector<1x256xi1> to vector<1x256xi1>
    %43 = vector.broadcast %42 : vector<1x256xi1> to vector<4x256xi1>
    %44 = vector.broadcast %cst_17 : f32 to vector<4x256xf32>
    %45 = arith.select %43, %30, %44 : vector<4x256xi1>, vector<4x256xf32>
    %c15_i32 = arith.constant 15 : i32
    %46 = tpu.dynamic_rotate %12 by %c15_i32 dim 1 : vector<4x256xf32>, i32 -> vector<4x256xf32>
    %c1_i32_18 = arith.constant 1 : i32
    %47 = vector.broadcast %c1_i32_18 : i32 to vector<1x256xi32>
    %48 = arith.cmpi sge, %0, %47 : vector<1x256xi32>
    %c17_i32_19 = arith.constant 17 : i32
    %49 = vector.broadcast %c17_i32_19 : i32 to vector<1x256xi32>
    %50 = arith.cmpi slt, %0, %49 : vector<1x256xi32>
    %51 = arith.andi %48, %50 : vector<1x256xi1>
    %c-1_i32 = arith.constant -1 : i32
    %52 = vector.broadcast %c-1_i32 : i32 to vector<1x256xi32>
    %53 = arith.cmpi sge, %1, %52 : vector<1x256xi32>
    %54 = arith.andi %51, %53 : vector<1x256xi1>
    %c15_i32_20 = arith.constant 15 : i32
    %55 = vector.broadcast %c15_i32_20 : i32 to vector<1x256xi32>
    %56 = arith.cmpi slt, %1, %55 : vector<1x256xi32>
    %57 = arith.andi %54, %56 : vector<1x256xi1>
    %cst_21 = arith.constant 0.000000e+00 : f32
    %58 = vector.shape_cast %57 : vector<1x256xi1> to vector<1x256xi1>
    %59 = vector.broadcast %58 : vector<1x256xi1> to vector<4x256xi1>
    %60 = vector.broadcast %cst_21 : f32 to vector<4x256xf32>
    %61 = arith.select %59, %46, %60 : vector<4x256xi1>, vector<4x256xf32>
    %c1_i32_22 = arith.constant 1 : i32
    %62 = tpu.dynamic_rotate %12 by %c1_i32_22 dim 1 : vector<4x256xf32>, i32 -> vector<4x256xf32>
    %c0_i32_23 = arith.constant 0 : i32
    %63 = vector.broadcast %c0_i32_23 : i32 to vector<1x256xi32>
    %64 = arith.cmpi sge, %0, %63 : vector<1x256xi32>
    %c16_i32_24 = arith.constant 16 : i32
    %65 = vector.broadcast %c16_i32_24 : i32 to vector<1x256xi32>
    %66 = arith.cmpi slt, %0, %65 : vector<1x256xi32>
    %67 = arith.andi %64, %66 : vector<1x256xi1>
    %c1_i32_25 = arith.constant 1 : i32
    %68 = vector.broadcast %c1_i32_25 : i32 to vector<1x256xi32>
    %69 = arith.cmpi sge, %1, %68 : vector<1x256xi32>
    %70 = arith.andi %67, %69 : vector<1x256xi1>
    %c17_i32_26 = arith.constant 17 : i32
    %71 = vector.broadcast %c17_i32_26 : i32 to vector<1x256xi32>
    %72 = arith.cmpi slt, %1, %71 : vector<1x256xi32>
    %73 = arith.andi %70, %72 : vector<1x256xi1>
    %cst_27 = arith.constant 0.000000e+00 : f32
    %74 = vector.shape_cast %73 : vector<1x256xi1> to vector<1x256xi1>
    %75 = vector.broadcast %74 : vector<1x256xi1> to vector<4x256xi1>
    %76 = vector.broadcast %cst_27 : f32 to vector<4x256xf32>
    %77 = arith.select %75, %62, %76 : vector<4x256xi1>, vector<4x256xf32>
    %c255_i32 = arith.constant 255 : i32
    %78 = tpu.dynamic_rotate %12 by %c255_i32 dim 1 : vector<4x256xf32>, i32 -> vector<4x256xf32>
    %c0_i32_28 = arith.constant 0 : i32
    %79 = vector.broadcast %c0_i32_28 : i32 to vector<1x256xi32>
    %80 = arith.cmpi sge, %0, %79 : vector<1x256xi32>
    %c16_i32_29 = arith.constant 16 : i32
    %81 = vector.broadcast %c16_i32_29 : i32 to vector<1x256xi32>
    %82 = arith.cmpi slt, %0, %81 : vector<1x256xi32>
    %83 = arith.andi %80, %82 : vector<1x256xi1>
    %c-1_i32_30 = arith.constant -1 : i32
    %84 = vector.broadcast %c-1_i32_30 : i32 to vector<1x256xi32>
    %85 = arith.cmpi sge, %1, %84 : vector<1x256xi32>
    %86 = arith.andi %83, %85 : vector<1x256xi1>
    %c15_i32_31 = arith.constant 15 : i32
    %87 = vector.broadcast %c15_i32_31 : i32 to vector<1x256xi32>
    %88 = arith.cmpi slt, %1, %87 : vector<1x256xi32>
    %89 = arith.andi %86, %88 : vector<1x256xi1>
    %cst_32 = arith.constant 0.000000e+00 : f32
    %90 = vector.shape_cast %89 : vector<1x256xi1> to vector<1x256xi1>
    %91 = vector.broadcast %90 : vector<1x256xi1> to vector<4x256xi1>
    %92 = vector.broadcast %cst_32 : f32 to vector<4x256xf32>
    %93 = arith.select %91, %78, %92 : vector<4x256xi1>, vector<4x256xf32>
    %c241_i32 = arith.constant 241 : i32
    %94 = tpu.dynamic_rotate %12 by %c241_i32 dim 1 : vector<4x256xf32>, i32 -> vector<4x256xf32>
    %c-1_i32_33 = arith.constant -1 : i32
    %95 = vector.broadcast %c-1_i32_33 : i32 to vector<1x256xi32>
    %96 = arith.cmpi sge, %0, %95 : vector<1x256xi32>
    %c15_i32_34 = arith.constant 15 : i32
    %97 = vector.broadcast %c15_i32_34 : i32 to vector<1x256xi32>
    %98 = arith.cmpi slt, %0, %97 : vector<1x256xi32>
    %99 = arith.andi %96, %98 : vector<1x256xi1>
    %c1_i32_35 = arith.constant 1 : i32
    %100 = vector.broadcast %c1_i32_35 : i32 to vector<1x256xi32>
    %101 = arith.cmpi sge, %1, %100 : vector<1x256xi32>
    %102 = arith.andi %99, %101 : vector<1x256xi1>
    %c17_i32_36 = arith.constant 17 : i32
    %103 = vector.broadcast %c17_i32_36 : i32 to vector<1x256xi32>
    %104 = arith.cmpi slt, %1, %103 : vector<1x256xi32>
    %105 = arith.andi %102, %104 : vector<1x256xi1>
    %cst_37 = arith.constant 0.000000e+00 : f32
    %106 = vector.shape_cast %105 : vector<1x256xi1> to vector<1x256xi1>
    %107 = vector.broadcast %106 : vector<1x256xi1> to vector<4x256xi1>
    %108 = vector.broadcast %cst_37 : f32 to vector<4x256xf32>
    %109 = arith.select %107, %94, %108 : vector<4x256xi1>, vector<4x256xf32>
    %c240_i32 = arith.constant 240 : i32
    %110 = tpu.dynamic_rotate %12 by %c240_i32 dim 1 : vector<4x256xf32>, i32 -> vector<4x256xf32>
    %c-1_i32_38 = arith.constant -1 : i32
    %111 = vector.broadcast %c-1_i32_38 : i32 to vector<1x256xi32>
    %112 = arith.cmpi sge, %0, %111 : vector<1x256xi32>
    %c15_i32_39 = arith.constant 15 : i32
    %113 = vector.broadcast %c15_i32_39 : i32 to vector<1x256xi32>
    %114 = arith.cmpi slt, %0, %113 : vector<1x256xi32>
    %115 = arith.andi %112, %114 : vector<1x256xi1>
    %c0_i32_40 = arith.constant 0 : i32
    %116 = vector.broadcast %c0_i32_40 : i32 to vector<1x256xi32>
    %117 = arith.cmpi sge, %1, %116 : vector<1x256xi32>
    %118 = arith.andi %115, %117 : vector<1x256xi1>
    %c16_i32_41 = arith.constant 16 : i32
    %119 = vector.broadcast %c16_i32_41 : i32 to vector<1x256xi32>
    %120 = arith.cmpi slt, %1, %119 : vector<1x256xi32>
    %121 = arith.andi %118, %120 : vector<1x256xi1>
    %cst_42 = arith.constant 0.000000e+00 : f32
    %122 = vector.shape_cast %121 : vector<1x256xi1> to vector<1x256xi1>
    %123 = vector.broadcast %122 : vector<1x256xi1> to vector<4x256xi1>
    %124 = vector.broadcast %cst_42 : f32 to vector<4x256xf32>
    %125 = arith.select %123, %110, %124 : vector<4x256xi1>, vector<4x256xf32>
    %c239_i32 = arith.constant 239 : i32
    %126 = tpu.dynamic_rotate %12 by %c239_i32 dim 1 : vector<4x256xf32>, i32 -> vector<4x256xf32>
    %c-1_i32_43 = arith.constant -1 : i32
    %127 = vector.broadcast %c-1_i32_43 : i32 to vector<1x256xi32>
    %128 = arith.cmpi sge, %0, %127 : vector<1x256xi32>
    %c15_i32_44 = arith.constant 15 : i32
    %129 = vector.broadcast %c15_i32_44 : i32 to vector<1x256xi32>
    %130 = arith.cmpi slt, %0, %129 : vector<1x256xi32>
    %131 = arith.andi %128, %130 : vector<1x256xi1>
    %c-1_i32_45 = arith.constant -1 : i32
    %132 = vector.broadcast %c-1_i32_45 : i32 to vector<1x256xi32>
    %133 = arith.cmpi sge, %1, %132 : vector<1x256xi32>
    %134 = arith.andi %131, %133 : vector<1x256xi1>
    %c15_i32_46 = arith.constant 15 : i32
    %135 = vector.broadcast %c15_i32_46 : i32 to vector<1x256xi32>
    %136 = arith.cmpi slt, %1, %135 : vector<1x256xi32>
    %137 = arith.andi %134, %136 : vector<1x256xi1>
    %cst_47 = arith.constant 0.000000e+00 : f32
    %138 = vector.shape_cast %137 : vector<1x256xi1> to vector<1x256xi1>
    %139 = vector.broadcast %138 : vector<1x256xi1> to vector<4x256xi1>
    %140 = vector.broadcast %cst_47 : f32 to vector<4x256xf32>
    %141 = arith.select %139, %126, %140 : vector<4x256xi1>, vector<4x256xf32>
    %142 = tpu.concatenate %29, %45, %61, %77, %12, %93, %109, %125, %141 in 0 : vector<4x256xf32>, vector<4x256xf32>, vector<4x256xf32>, vector<4x256xf32>, vector<4x256xf32>, vector<4x256xf32>, vector<4x256xf32>, vector<4x256xf32>, vector<4x256xf32> -> vector<36x256xf32>
    %c0_48 = arith.constant 0 : index
    %c0_49 = arith.constant 0 : index
    %143 = vector.load %arg5[%c0_48, %c0_49] : memref<8x36xf32, #tpu.memory_space<vmem>>, vector<8x36xf32>
    %cst_50 = arith.constant dense<0.000000e+00> : vector<8x256xf32>
    %144 = tpu.matmul %143, %142, %cst_50 {dimension_numbers = #tpu.dot_dimension_numbers<[1], [0], [0], [1], [0, 0, 1, 1], [], []>} : vector<8x36xf32>, vector<36x256xf32>, vector<8x256xf32> -> vector<8x256xf32>
    %c0_51 = arith.constant 0 : index
    %c0_52 = arith.constant 0 : index
    %145 = vector.load %arg6[%c0_51, %c0_52] : memref<8x1xf32, #tpu.memory_space<vmem>>, vector<8x1xf32>
    %146 = vector.broadcast %145 : vector<8x1xf32> to vector<8x256xf32>
    %147 = arith.addf %144, %146 : vector<8x256xf32>
    %cst_53 = arith.constant 0.000000e+00 : f32
    %148 = vector.broadcast %cst_53 : f32 to vector<8x256xf32>
    %149 = arith.maximumf %147, %148 : vector<8x256xf32>
    %c34_i32 = arith.constant 34 : i32
    %150 = tpu.dynamic_rotate %13 by %c34_i32 dim 1 : vector<4x256xf32>, i32 -> vector<4x256xf32>
    %c2_i32 = arith.constant 2 : i32
    %151 = vector.broadcast %c2_i32 : i32 to vector<1x256xi32>
    %152 = arith.cmpi sge, %0, %151 : vector<1x256xi32>
    %c18_i32 = arith.constant 18 : i32
    %153 = vector.broadcast %c18_i32 : i32 to vector<1x256xi32>
    %154 = arith.cmpi slt, %0, %153 : vector<1x256xi32>
    %155 = arith.andi %152, %154 : vector<1x256xi1>
    %c2_i32_54 = arith.constant 2 : i32
    %156 = vector.broadcast %c2_i32_54 : i32 to vector<1x256xi32>
    %157 = arith.cmpi sge, %1, %156 : vector<1x256xi32>
    %158 = arith.andi %155, %157 : vector<1x256xi1>
    %c18_i32_55 = arith.constant 18 : i32
    %159 = vector.broadcast %c18_i32_55 : i32 to vector<1x256xi32>
    %160 = arith.cmpi slt, %1, %159 : vector<1x256xi32>
    %161 = arith.andi %158, %160 : vector<1x256xi1>
    %cst_56 = arith.constant 0.000000e+00 : f32
    %162 = vector.shape_cast %161 : vector<1x256xi1> to vector<1x256xi1>
    %163 = vector.broadcast %162 : vector<1x256xi1> to vector<4x256xi1>
    %164 = vector.broadcast %cst_56 : f32 to vector<4x256xf32>
    %165 = arith.select %163, %150, %164 : vector<4x256xi1>, vector<4x256xf32>
    %c33_i32 = arith.constant 33 : i32
    %166 = tpu.dynamic_rotate %13 by %c33_i32 dim 1 : vector<4x256xf32>, i32 -> vector<4x256xf32>
    %c2_i32_57 = arith.constant 2 : i32
    %167 = vector.broadcast %c2_i32_57 : i32 to vector<1x256xi32>
    %168 = arith.cmpi sge, %0, %167 : vector<1x256xi32>
    %c18_i32_58 = arith.constant 18 : i32
    %169 = vector.broadcast %c18_i32_58 : i32 to vector<1x256xi32>
    %170 = arith.cmpi slt, %0, %169 : vector<1x256xi32>
    %171 = arith.andi %168, %170 : vector<1x256xi1>
    %c1_i32_59 = arith.constant 1 : i32
    %172 = vector.broadcast %c1_i32_59 : i32 to vector<1x256xi32>
    %173 = arith.cmpi sge, %1, %172 : vector<1x256xi32>
    %174 = arith.andi %171, %173 : vector<1x256xi1>
    %c17_i32_60 = arith.constant 17 : i32
    %175 = vector.broadcast %c17_i32_60 : i32 to vector<1x256xi32>
    %176 = arith.cmpi slt, %1, %175 : vector<1x256xi32>
    %177 = arith.andi %174, %176 : vector<1x256xi1>
    %cst_61 = arith.constant 0.000000e+00 : f32
    %178 = vector.shape_cast %177 : vector<1x256xi1> to vector<1x256xi1>
    %179 = vector.broadcast %178 : vector<1x256xi1> to vector<4x256xi1>
    %180 = vector.broadcast %cst_61 : f32 to vector<4x256xf32>
    %181 = arith.select %179, %166, %180 : vector<4x256xi1>, vector<4x256xf32>
    %c32_i32 = arith.constant 32 : i32
    %182 = tpu.dynamic_rotate %13 by %c32_i32 dim 1 : vector<4x256xf32>, i32 -> vector<4x256xf32>
    %c2_i32_62 = arith.constant 2 : i32
    %183 = vector.broadcast %c2_i32_62 : i32 to vector<1x256xi32>
    %184 = arith.cmpi sge, %0, %183 : vector<1x256xi32>
    %c18_i32_63 = arith.constant 18 : i32
    %185 = vector.broadcast %c18_i32_63 : i32 to vector<1x256xi32>
    %186 = arith.cmpi slt, %0, %185 : vector<1x256xi32>
    %187 = arith.andi %184, %186 : vector<1x256xi1>
    %c0_i32_64 = arith.constant 0 : i32
    %188 = vector.broadcast %c0_i32_64 : i32 to vector<1x256xi32>
    %189 = arith.cmpi sge, %1, %188 : vector<1x256xi32>
    %190 = arith.andi %187, %189 : vector<1x256xi1>
    %c16_i32_65 = arith.constant 16 : i32
    %191 = vector.broadcast %c16_i32_65 : i32 to vector<1x256xi32>
    %192 = arith.cmpi slt, %1, %191 : vector<1x256xi32>
    %193 = arith.andi %190, %192 : vector<1x256xi1>
    %cst_66 = arith.constant 0.000000e+00 : f32
    %194 = vector.shape_cast %193 : vector<1x256xi1> to vector<1x256xi1>
    %195 = vector.broadcast %194 : vector<1x256xi1> to vector<4x256xi1>
    %196 = vector.broadcast %cst_66 : f32 to vector<4x256xf32>
    %197 = arith.select %195, %182, %196 : vector<4x256xi1>, vector<4x256xf32>
    %c31_i32 = arith.constant 31 : i32
    %198 = tpu.dynamic_rotate %13 by %c31_i32 dim 1 : vector<4x256xf32>, i32 -> vector<4x256xf32>
    %c2_i32_67 = arith.constant 2 : i32
    %199 = vector.broadcast %c2_i32_67 : i32 to vector<1x256xi32>
    %200 = arith.cmpi sge, %0, %199 : vector<1x256xi32>
    %c18_i32_68 = arith.constant 18 : i32
    %201 = vector.broadcast %c18_i32_68 : i32 to vector<1x256xi32>
    %202 = arith.cmpi slt, %0, %201 : vector<1x256xi32>
    %203 = arith.andi %200, %202 : vector<1x256xi1>
    %c-1_i32_69 = arith.constant -1 : i32
    %204 = vector.broadcast %c-1_i32_69 : i32 to vector<1x256xi32>
    %205 = arith.cmpi sge, %1, %204 : vector<1x256xi32>
    %206 = arith.andi %203, %205 : vector<1x256xi1>
    %c15_i32_70 = arith.constant 15 : i32
    %207 = vector.broadcast %c15_i32_70 : i32 to vector<1x256xi32>
    %208 = arith.cmpi slt, %1, %207 : vector<1x256xi32>
    %209 = arith.andi %206, %208 : vector<1x256xi1>
    %cst_71 = arith.constant 0.000000e+00 : f32
    %210 = vector.shape_cast %209 : vector<1x256xi1> to vector<1x256xi1>
    %211 = vector.broadcast %210 : vector<1x256xi1> to vector<4x256xi1>
    %212 = vector.broadcast %cst_71 : f32 to vector<4x256xf32>
    %213 = arith.select %211, %198, %212 : vector<4x256xi1>, vector<4x256xf32>
    %c30_i32 = arith.constant 30 : i32
    %214 = tpu.dynamic_rotate %13 by %c30_i32 dim 1 : vector<4x256xf32>, i32 -> vector<4x256xf32>
    %c2_i32_72 = arith.constant 2 : i32
    %215 = vector.broadcast %c2_i32_72 : i32 to vector<1x256xi32>
    %216 = arith.cmpi sge, %0, %215 : vector<1x256xi32>
    %c18_i32_73 = arith.constant 18 : i32
    %217 = vector.broadcast %c18_i32_73 : i32 to vector<1x256xi32>
    %218 = arith.cmpi slt, %0, %217 : vector<1x256xi32>
    %219 = arith.andi %216, %218 : vector<1x256xi1>
    %c-2_i32 = arith.constant -2 : i32
    %220 = vector.broadcast %c-2_i32 : i32 to vector<1x256xi32>
    %221 = arith.cmpi sge, %1, %220 : vector<1x256xi32>
    %222 = arith.andi %219, %221 : vector<1x256xi1>
    %c14_i32 = arith.constant 14 : i32
    %223 = vector.broadcast %c14_i32 : i32 to vector<1x256xi32>
    %224 = arith.cmpi slt, %1, %223 : vector<1x256xi32>
    %225 = arith.andi %222, %224 : vector<1x256xi1>
    %cst_74 = arith.constant 0.000000e+00 : f32
    %226 = vector.shape_cast %225 : vector<1x256xi1> to vector<1x256xi1>
    %227 = vector.broadcast %226 : vector<1x256xi1> to vector<4x256xi1>
    %228 = vector.broadcast %cst_74 : f32 to vector<4x256xf32>
    %229 = arith.select %227, %214, %228 : vector<4x256xi1>, vector<4x256xf32>
    %c18_i32_75 = arith.constant 18 : i32
    %230 = tpu.dynamic_rotate %13 by %c18_i32_75 dim 1 : vector<4x256xf32>, i32 -> vector<4x256xf32>
    %c1_i32_76 = arith.constant 1 : i32
    %231 = vector.broadcast %c1_i32_76 : i32 to vector<1x256xi32>
    %232 = arith.cmpi sge, %0, %231 : vector<1x256xi32>
    %c17_i32_77 = arith.constant 17 : i32
    %233 = vector.broadcast %c17_i32_77 : i32 to vector<1x256xi32>
    %234 = arith.cmpi slt, %0, %233 : vector<1x256xi32>
    %235 = arith.andi %232, %234 : vector<1x256xi1>
    %c2_i32_78 = arith.constant 2 : i32
    %236 = vector.broadcast %c2_i32_78 : i32 to vector<1x256xi32>
    %237 = arith.cmpi sge, %1, %236 : vector<1x256xi32>
    %238 = arith.andi %235, %237 : vector<1x256xi1>
    %c18_i32_79 = arith.constant 18 : i32
    %239 = vector.broadcast %c18_i32_79 : i32 to vector<1x256xi32>
    %240 = arith.cmpi slt, %1, %239 : vector<1x256xi32>
    %241 = arith.andi %238, %240 : vector<1x256xi1>
    %cst_80 = arith.constant 0.000000e+00 : f32
    %242 = vector.shape_cast %241 : vector<1x256xi1> to vector<1x256xi1>
    %243 = vector.broadcast %242 : vector<1x256xi1> to vector<4x256xi1>
    %244 = vector.broadcast %cst_80 : f32 to vector<4x256xf32>
    %245 = arith.select %243, %230, %244 : vector<4x256xi1>, vector<4x256xf32>
    %c17_i32_81 = arith.constant 17 : i32
    %246 = tpu.dynamic_rotate %13 by %c17_i32_81 dim 1 : vector<4x256xf32>, i32 -> vector<4x256xf32>
    %c1_i32_82 = arith.constant 1 : i32
    %247 = vector.broadcast %c1_i32_82 : i32 to vector<1x256xi32>
    %248 = arith.cmpi sge, %0, %247 : vector<1x256xi32>
    %c17_i32_83 = arith.constant 17 : i32
    %249 = vector.broadcast %c17_i32_83 : i32 to vector<1x256xi32>
    %250 = arith.cmpi slt, %0, %249 : vector<1x256xi32>
    %251 = arith.andi %248, %250 : vector<1x256xi1>
    %c1_i32_84 = arith.constant 1 : i32
    %252 = vector.broadcast %c1_i32_84 : i32 to vector<1x256xi32>
    %253 = arith.cmpi sge, %1, %252 : vector<1x256xi32>
    %254 = arith.andi %251, %253 : vector<1x256xi1>
    %c17_i32_85 = arith.constant 17 : i32
    %255 = vector.broadcast %c17_i32_85 : i32 to vector<1x256xi32>
    %256 = arith.cmpi slt, %1, %255 : vector<1x256xi32>
    %257 = arith.andi %254, %256 : vector<1x256xi1>
    %cst_86 = arith.constant 0.000000e+00 : f32
    %258 = vector.shape_cast %257 : vector<1x256xi1> to vector<1x256xi1>
    %259 = vector.broadcast %258 : vector<1x256xi1> to vector<4x256xi1>
    %260 = vector.broadcast %cst_86 : f32 to vector<4x256xf32>
    %261 = arith.select %259, %246, %260 : vector<4x256xi1>, vector<4x256xf32>
    %c16_i32_87 = arith.constant 16 : i32
    %262 = tpu.dynamic_rotate %13 by %c16_i32_87 dim 1 : vector<4x256xf32>, i32 -> vector<4x256xf32>
    %c1_i32_88 = arith.constant 1 : i32
    %263 = vector.broadcast %c1_i32_88 : i32 to vector<1x256xi32>
    %264 = arith.cmpi sge, %0, %263 : vector<1x256xi32>
    %c17_i32_89 = arith.constant 17 : i32
    %265 = vector.broadcast %c17_i32_89 : i32 to vector<1x256xi32>
    %266 = arith.cmpi slt, %0, %265 : vector<1x256xi32>
    %267 = arith.andi %264, %266 : vector<1x256xi1>
    %c0_i32_90 = arith.constant 0 : i32
    %268 = vector.broadcast %c0_i32_90 : i32 to vector<1x256xi32>
    %269 = arith.cmpi sge, %1, %268 : vector<1x256xi32>
    %270 = arith.andi %267, %269 : vector<1x256xi1>
    %c16_i32_91 = arith.constant 16 : i32
    %271 = vector.broadcast %c16_i32_91 : i32 to vector<1x256xi32>
    %272 = arith.cmpi slt, %1, %271 : vector<1x256xi32>
    %273 = arith.andi %270, %272 : vector<1x256xi1>
    %cst_92 = arith.constant 0.000000e+00 : f32
    %274 = vector.shape_cast %273 : vector<1x256xi1> to vector<1x256xi1>
    %275 = vector.broadcast %274 : vector<1x256xi1> to vector<4x256xi1>
    %276 = vector.broadcast %cst_92 : f32 to vector<4x256xf32>
    %277 = arith.select %275, %262, %276 : vector<4x256xi1>, vector<4x256xf32>
    %c15_i32_93 = arith.constant 15 : i32
    %278 = tpu.dynamic_rotate %13 by %c15_i32_93 dim 1 : vector<4x256xf32>, i32 -> vector<4x256xf32>
    %c1_i32_94 = arith.constant 1 : i32
    %279 = vector.broadcast %c1_i32_94 : i32 to vector<1x256xi32>
    %280 = arith.cmpi sge, %0, %279 : vector<1x256xi32>
    %c17_i32_95 = arith.constant 17 : i32
    %281 = vector.broadcast %c17_i32_95 : i32 to vector<1x256xi32>
    %282 = arith.cmpi slt, %0, %281 : vector<1x256xi32>
    %283 = arith.andi %280, %282 : vector<1x256xi1>
    %c-1_i32_96 = arith.constant -1 : i32
    %284 = vector.broadcast %c-1_i32_96 : i32 to vector<1x256xi32>
    %285 = arith.cmpi sge, %1, %284 : vector<1x256xi32>
    %286 = arith.andi %283, %285 : vector<1x256xi1>
    %c15_i32_97 = arith.constant 15 : i32
    %287 = vector.broadcast %c15_i32_97 : i32 to vector<1x256xi32>
    %288 = arith.cmpi slt, %1, %287 : vector<1x256xi32>
    %289 = arith.andi %286, %288 : vector<1x256xi1>
    %cst_98 = arith.constant 0.000000e+00 : f32
    %290 = vector.shape_cast %289 : vector<1x256xi1> to vector<1x256xi1>
    %291 = vector.broadcast %290 : vector<1x256xi1> to vector<4x256xi1>
    %292 = vector.broadcast %cst_98 : f32 to vector<4x256xf32>
    %293 = arith.select %291, %278, %292 : vector<4x256xi1>, vector<4x256xf32>
    %c14_i32_99 = arith.constant 14 : i32
    %294 = tpu.dynamic_rotate %13 by %c14_i32_99 dim 1 : vector<4x256xf32>, i32 -> vector<4x256xf32>
    %c1_i32_100 = arith.constant 1 : i32
    %295 = vector.broadcast %c1_i32_100 : i32 to vector<1x256xi32>
    %296 = arith.cmpi sge, %0, %295 : vector<1x256xi32>
    %c17_i32_101 = arith.constant 17 : i32
    %297 = vector.broadcast %c17_i32_101 : i32 to vector<1x256xi32>
    %298 = arith.cmpi slt, %0, %297 : vector<1x256xi32>
    %299 = arith.andi %296, %298 : vector<1x256xi1>
    %c-2_i32_102 = arith.constant -2 : i32
    %300 = vector.broadcast %c-2_i32_102 : i32 to vector<1x256xi32>
    %301 = arith.cmpi sge, %1, %300 : vector<1x256xi32>
    %302 = arith.andi %299, %301 : vector<1x256xi1>
    %c14_i32_103 = arith.constant 14 : i32
    %303 = vector.broadcast %c14_i32_103 : i32 to vector<1x256xi32>
    %304 = arith.cmpi slt, %1, %303 : vector<1x256xi32>
    %305 = arith.andi %302, %304 : vector<1x256xi1>
    %cst_104 = arith.constant 0.000000e+00 : f32
    %306 = vector.shape_cast %305 : vector<1x256xi1> to vector<1x256xi1>
    %307 = vector.broadcast %306 : vector<1x256xi1> to vector<4x256xi1>
    %308 = vector.broadcast %cst_104 : f32 to vector<4x256xf32>
    %309 = arith.select %307, %294, %308 : vector<4x256xi1>, vector<4x256xf32>
    %c2_i32_105 = arith.constant 2 : i32
    %310 = tpu.dynamic_rotate %13 by %c2_i32_105 dim 1 : vector<4x256xf32>, i32 -> vector<4x256xf32>
    %c0_i32_106 = arith.constant 0 : i32
    %311 = vector.broadcast %c0_i32_106 : i32 to vector<1x256xi32>
    %312 = arith.cmpi sge, %0, %311 : vector<1x256xi32>
    %c16_i32_107 = arith.constant 16 : i32
    %313 = vector.broadcast %c16_i32_107 : i32 to vector<1x256xi32>
    %314 = arith.cmpi slt, %0, %313 : vector<1x256xi32>
    %315 = arith.andi %312, %314 : vector<1x256xi1>
    %c2_i32_108 = arith.constant 2 : i32
    %316 = vector.broadcast %c2_i32_108 : i32 to vector<1x256xi32>
    %317 = arith.cmpi sge, %1, %316 : vector<1x256xi32>
    %318 = arith.andi %315, %317 : vector<1x256xi1>
    %c18_i32_109 = arith.constant 18 : i32
    %319 = vector.broadcast %c18_i32_109 : i32 to vector<1x256xi32>
    %320 = arith.cmpi slt, %1, %319 : vector<1x256xi32>
    %321 = arith.andi %318, %320 : vector<1x256xi1>
    %cst_110 = arith.constant 0.000000e+00 : f32
    %322 = vector.shape_cast %321 : vector<1x256xi1> to vector<1x256xi1>
    %323 = vector.broadcast %322 : vector<1x256xi1> to vector<4x256xi1>
    %324 = vector.broadcast %cst_110 : f32 to vector<4x256xf32>
    %325 = arith.select %323, %310, %324 : vector<4x256xi1>, vector<4x256xf32>
    %c1_i32_111 = arith.constant 1 : i32
    %326 = tpu.dynamic_rotate %13 by %c1_i32_111 dim 1 : vector<4x256xf32>, i32 -> vector<4x256xf32>
    %c0_i32_112 = arith.constant 0 : i32
    %327 = vector.broadcast %c0_i32_112 : i32 to vector<1x256xi32>
    %328 = arith.cmpi sge, %0, %327 : vector<1x256xi32>
    %c16_i32_113 = arith.constant 16 : i32
    %329 = vector.broadcast %c16_i32_113 : i32 to vector<1x256xi32>
    %330 = arith.cmpi slt, %0, %329 : vector<1x256xi32>
    %331 = arith.andi %328, %330 : vector<1x256xi1>
    %c1_i32_114 = arith.constant 1 : i32
    %332 = vector.broadcast %c1_i32_114 : i32 to vector<1x256xi32>
    %333 = arith.cmpi sge, %1, %332 : vector<1x256xi32>
    %334 = arith.andi %331, %333 : vector<1x256xi1>
    %c17_i32_115 = arith.constant 17 : i32
    %335 = vector.broadcast %c17_i32_115 : i32 to vector<1x256xi32>
    %336 = arith.cmpi slt, %1, %335 : vector<1x256xi32>
    %337 = arith.andi %334, %336 : vector<1x256xi1>
    %cst_116 = arith.constant 0.000000e+00 : f32
    %338 = vector.shape_cast %337 : vector<1x256xi1> to vector<1x256xi1>
    %339 = vector.broadcast %338 : vector<1x256xi1> to vector<4x256xi1>
    %340 = vector.broadcast %cst_116 : f32 to vector<4x256xf32>
    %341 = arith.select %339, %326, %340 : vector<4x256xi1>, vector<4x256xf32>
    %c255_i32_117 = arith.constant 255 : i32
    %342 = tpu.dynamic_rotate %13 by %c255_i32_117 dim 1 : vector<4x256xf32>, i32 -> vector<4x256xf32>
    %c0_i32_118 = arith.constant 0 : i32
    %343 = vector.broadcast %c0_i32_118 : i32 to vector<1x256xi32>
    %344 = arith.cmpi sge, %0, %343 : vector<1x256xi32>
    %c16_i32_119 = arith.constant 16 : i32
    %345 = vector.broadcast %c16_i32_119 : i32 to vector<1x256xi32>
    %346 = arith.cmpi slt, %0, %345 : vector<1x256xi32>
    %347 = arith.andi %344, %346 : vector<1x256xi1>
    %c-1_i32_120 = arith.constant -1 : i32
    %348 = vector.broadcast %c-1_i32_120 : i32 to vector<1x256xi32>
    %349 = arith.cmpi sge, %1, %348 : vector<1x256xi32>
    %350 = arith.andi %347, %349 : vector<1x256xi1>
    %c15_i32_121 = arith.constant 15 : i32
    %351 = vector.broadcast %c15_i32_121 : i32 to vector<1x256xi32>
    %352 = arith.cmpi slt, %1, %351 : vector<1x256xi32>
    %353 = arith.andi %350, %352 : vector<1x256xi1>
    %cst_122 = arith.constant 0.000000e+00 : f32
    %354 = vector.shape_cast %353 : vector<1x256xi1> to vector<1x256xi1>
    %355 = vector.broadcast %354 : vector<1x256xi1> to vector<4x256xi1>
    %356 = vector.broadcast %cst_122 : f32 to vector<4x256xf32>
    %357 = arith.select %355, %342, %356 : vector<4x256xi1>, vector<4x256xf32>
    %c254_i32 = arith.constant 254 : i32
    %358 = tpu.dynamic_rotate %13 by %c254_i32 dim 1 : vector<4x256xf32>, i32 -> vector<4x256xf32>
    %c0_i32_123 = arith.constant 0 : i32
    %359 = vector.broadcast %c0_i32_123 : i32 to vector<1x256xi32>
    %360 = arith.cmpi sge, %0, %359 : vector<1x256xi32>
    %c16_i32_124 = arith.constant 16 : i32
    %361 = vector.broadcast %c16_i32_124 : i32 to vector<1x256xi32>
    %362 = arith.cmpi slt, %0, %361 : vector<1x256xi32>
    %363 = arith.andi %360, %362 : vector<1x256xi1>
    %c-2_i32_125 = arith.constant -2 : i32
    %364 = vector.broadcast %c-2_i32_125 : i32 to vector<1x256xi32>
    %365 = arith.cmpi sge, %1, %364 : vector<1x256xi32>
    %366 = arith.andi %363, %365 : vector<1x256xi1>
    %c14_i32_126 = arith.constant 14 : i32
    %367 = vector.broadcast %c14_i32_126 : i32 to vector<1x256xi32>
    %368 = arith.cmpi slt, %1, %367 : vector<1x256xi32>
    %369 = arith.andi %366, %368 : vector<1x256xi1>
    %cst_127 = arith.constant 0.000000e+00 : f32
    %370 = vector.shape_cast %369 : vector<1x256xi1> to vector<1x256xi1>
    %371 = vector.broadcast %370 : vector<1x256xi1> to vector<4x256xi1>
    %372 = vector.broadcast %cst_127 : f32 to vector<4x256xf32>
    %373 = arith.select %371, %358, %372 : vector<4x256xi1>, vector<4x256xf32>
    %c242_i32 = arith.constant 242 : i32
    %374 = tpu.dynamic_rotate %13 by %c242_i32 dim 1 : vector<4x256xf32>, i32 -> vector<4x256xf32>
    %c-1_i32_128 = arith.constant -1 : i32
    %375 = vector.broadcast %c-1_i32_128 : i32 to vector<1x256xi32>
    %376 = arith.cmpi sge, %0, %375 : vector<1x256xi32>
    %c15_i32_129 = arith.constant 15 : i32
    %377 = vector.broadcast %c15_i32_129 : i32 to vector<1x256xi32>
    %378 = arith.cmpi slt, %0, %377 : vector<1x256xi32>
    %379 = arith.andi %376, %378 : vector<1x256xi1>
    %c2_i32_130 = arith.constant 2 : i32
    %380 = vector.broadcast %c2_i32_130 : i32 to vector<1x256xi32>
    %381 = arith.cmpi sge, %1, %380 : vector<1x256xi32>
    %382 = arith.andi %379, %381 : vector<1x256xi1>
    %c18_i32_131 = arith.constant 18 : i32
    %383 = vector.broadcast %c18_i32_131 : i32 to vector<1x256xi32>
    %384 = arith.cmpi slt, %1, %383 : vector<1x256xi32>
    %385 = arith.andi %382, %384 : vector<1x256xi1>
    %cst_132 = arith.constant 0.000000e+00 : f32
    %386 = vector.shape_cast %385 : vector<1x256xi1> to vector<1x256xi1>
    %387 = vector.broadcast %386 : vector<1x256xi1> to vector<4x256xi1>
    %388 = vector.broadcast %cst_132 : f32 to vector<4x256xf32>
    %389 = arith.select %387, %374, %388 : vector<4x256xi1>, vector<4x256xf32>
    %c241_i32_133 = arith.constant 241 : i32
    %390 = tpu.dynamic_rotate %13 by %c241_i32_133 dim 1 : vector<4x256xf32>, i32 -> vector<4x256xf32>
    %c-1_i32_134 = arith.constant -1 : i32
    %391 = vector.broadcast %c-1_i32_134 : i32 to vector<1x256xi32>
    %392 = arith.cmpi sge, %0, %391 : vector<1x256xi32>
    %c15_i32_135 = arith.constant 15 : i32
    %393 = vector.broadcast %c15_i32_135 : i32 to vector<1x256xi32>
    %394 = arith.cmpi slt, %0, %393 : vector<1x256xi32>
    %395 = arith.andi %392, %394 : vector<1x256xi1>
    %c1_i32_136 = arith.constant 1 : i32
    %396 = vector.broadcast %c1_i32_136 : i32 to vector<1x256xi32>
    %397 = arith.cmpi sge, %1, %396 : vector<1x256xi32>
    %398 = arith.andi %395, %397 : vector<1x256xi1>
    %c17_i32_137 = arith.constant 17 : i32
    %399 = vector.broadcast %c17_i32_137 : i32 to vector<1x256xi32>
    %400 = arith.cmpi slt, %1, %399 : vector<1x256xi32>
    %401 = arith.andi %398, %400 : vector<1x256xi1>
    %cst_138 = arith.constant 0.000000e+00 : f32
    %402 = vector.shape_cast %401 : vector<1x256xi1> to vector<1x256xi1>
    %403 = vector.broadcast %402 : vector<1x256xi1> to vector<4x256xi1>
    %404 = vector.broadcast %cst_138 : f32 to vector<4x256xf32>
    %405 = arith.select %403, %390, %404 : vector<4x256xi1>, vector<4x256xf32>
    %c240_i32_139 = arith.constant 240 : i32
    %406 = tpu.dynamic_rotate %13 by %c240_i32_139 dim 1 : vector<4x256xf32>, i32 -> vector<4x256xf32>
    %c-1_i32_140 = arith.constant -1 : i32
    %407 = vector.broadcast %c-1_i32_140 : i32 to vector<1x256xi32>
    %408 = arith.cmpi sge, %0, %407 : vector<1x256xi32>
    %c15_i32_141 = arith.constant 15 : i32
    %409 = vector.broadcast %c15_i32_141 : i32 to vector<1x256xi32>
    %410 = arith.cmpi slt, %0, %409 : vector<1x256xi32>
    %411 = arith.andi %408, %410 : vector<1x256xi1>
    %c0_i32_142 = arith.constant 0 : i32
    %412 = vector.broadcast %c0_i32_142 : i32 to vector<1x256xi32>
    %413 = arith.cmpi sge, %1, %412 : vector<1x256xi32>
    %414 = arith.andi %411, %413 : vector<1x256xi1>
    %c16_i32_143 = arith.constant 16 : i32
    %415 = vector.broadcast %c16_i32_143 : i32 to vector<1x256xi32>
    %416 = arith.cmpi slt, %1, %415 : vector<1x256xi32>
    %417 = arith.andi %414, %416 : vector<1x256xi1>
    %cst_144 = arith.constant 0.000000e+00 : f32
    %418 = vector.shape_cast %417 : vector<1x256xi1> to vector<1x256xi1>
    %419 = vector.broadcast %418 : vector<1x256xi1> to vector<4x256xi1>
    %420 = vector.broadcast %cst_144 : f32 to vector<4x256xf32>
    %421 = arith.select %419, %406, %420 : vector<4x256xi1>, vector<4x256xf32>
    %c239_i32_145 = arith.constant 239 : i32
    %422 = tpu.dynamic_rotate %13 by %c239_i32_145 dim 1 : vector<4x256xf32>, i32 -> vector<4x256xf32>
    %c-1_i32_146 = arith.constant -1 : i32
    %423 = vector.broadcast %c-1_i32_146 : i32 to vector<1x256xi32>
    %424 = arith.cmpi sge, %0, %423 : vector<1x256xi32>
    %c15_i32_147 = arith.constant 15 : i32
    %425 = vector.broadcast %c15_i32_147 : i32 to vector<1x256xi32>
    %426 = arith.cmpi slt, %0, %425 : vector<1x256xi32>
    %427 = arith.andi %424, %426 : vector<1x256xi1>
    %c-1_i32_148 = arith.constant -1 : i32
    %428 = vector.broadcast %c-1_i32_148 : i32 to vector<1x256xi32>
    %429 = arith.cmpi sge, %1, %428 : vector<1x256xi32>
    %430 = arith.andi %427, %429 : vector<1x256xi1>
    %c15_i32_149 = arith.constant 15 : i32
    %431 = vector.broadcast %c15_i32_149 : i32 to vector<1x256xi32>
    %432 = arith.cmpi slt, %1, %431 : vector<1x256xi32>
    %433 = arith.andi %430, %432 : vector<1x256xi1>
    %cst_150 = arith.constant 0.000000e+00 : f32
    %434 = vector.shape_cast %433 : vector<1x256xi1> to vector<1x256xi1>
    %435 = vector.broadcast %434 : vector<1x256xi1> to vector<4x256xi1>
    %436 = vector.broadcast %cst_150 : f32 to vector<4x256xf32>
    %437 = arith.select %435, %422, %436 : vector<4x256xi1>, vector<4x256xf32>
    %c238_i32 = arith.constant 238 : i32
    %438 = tpu.dynamic_rotate %13 by %c238_i32 dim 1 : vector<4x256xf32>, i32 -> vector<4x256xf32>
    %c-1_i32_151 = arith.constant -1 : i32
    %439 = vector.broadcast %c-1_i32_151 : i32 to vector<1x256xi32>
    %440 = arith.cmpi sge, %0, %439 : vector<1x256xi32>
    %c15_i32_152 = arith.constant 15 : i32
    %441 = vector.broadcast %c15_i32_152 : i32 to vector<1x256xi32>
    %442 = arith.cmpi slt, %0, %441 : vector<1x256xi32>
    %443 = arith.andi %440, %442 : vector<1x256xi1>
    %c-2_i32_153 = arith.constant -2 : i32
    %444 = vector.broadcast %c-2_i32_153 : i32 to vector<1x256xi32>
    %445 = arith.cmpi sge, %1, %444 : vector<1x256xi32>
    %446 = arith.andi %443, %445 : vector<1x256xi1>
    %c14_i32_154 = arith.constant 14 : i32
    %447 = vector.broadcast %c14_i32_154 : i32 to vector<1x256xi32>
    %448 = arith.cmpi slt, %1, %447 : vector<1x256xi32>
    %449 = arith.andi %446, %448 : vector<1x256xi1>
    %cst_155 = arith.constant 0.000000e+00 : f32
    %450 = vector.shape_cast %449 : vector<1x256xi1> to vector<1x256xi1>
    %451 = vector.broadcast %450 : vector<1x256xi1> to vector<4x256xi1>
    %452 = vector.broadcast %cst_155 : f32 to vector<4x256xf32>
    %453 = arith.select %451, %438, %452 : vector<4x256xi1>, vector<4x256xf32>
    %c226_i32 = arith.constant 226 : i32
    %454 = tpu.dynamic_rotate %13 by %c226_i32 dim 1 : vector<4x256xf32>, i32 -> vector<4x256xf32>
    %c-2_i32_156 = arith.constant -2 : i32
    %455 = vector.broadcast %c-2_i32_156 : i32 to vector<1x256xi32>
    %456 = arith.cmpi sge, %0, %455 : vector<1x256xi32>
    %c14_i32_157 = arith.constant 14 : i32
    %457 = vector.broadcast %c14_i32_157 : i32 to vector<1x256xi32>
    %458 = arith.cmpi slt, %0, %457 : vector<1x256xi32>
    %459 = arith.andi %456, %458 : vector<1x256xi1>
    %c2_i32_158 = arith.constant 2 : i32
    %460 = vector.broadcast %c2_i32_158 : i32 to vector<1x256xi32>
    %461 = arith.cmpi sge, %1, %460 : vector<1x256xi32>
    %462 = arith.andi %459, %461 : vector<1x256xi1>
    %c18_i32_159 = arith.constant 18 : i32
    %463 = vector.broadcast %c18_i32_159 : i32 to vector<1x256xi32>
    %464 = arith.cmpi slt, %1, %463 : vector<1x256xi32>
    %465 = arith.andi %462, %464 : vector<1x256xi1>
    %cst_160 = arith.constant 0.000000e+00 : f32
    %466 = vector.shape_cast %465 : vector<1x256xi1> to vector<1x256xi1>
    %467 = vector.broadcast %466 : vector<1x256xi1> to vector<4x256xi1>
    %468 = vector.broadcast %cst_160 : f32 to vector<4x256xf32>
    %469 = arith.select %467, %454, %468 : vector<4x256xi1>, vector<4x256xf32>
    %c225_i32 = arith.constant 225 : i32
    %470 = tpu.dynamic_rotate %13 by %c225_i32 dim 1 : vector<4x256xf32>, i32 -> vector<4x256xf32>
    %c-2_i32_161 = arith.constant -2 : i32
    %471 = vector.broadcast %c-2_i32_161 : i32 to vector<1x256xi32>
    %472 = arith.cmpi sge, %0, %471 : vector<1x256xi32>
    %c14_i32_162 = arith.constant 14 : i32
    %473 = vector.broadcast %c14_i32_162 : i32 to vector<1x256xi32>
    %474 = arith.cmpi slt, %0, %473 : vector<1x256xi32>
    %475 = arith.andi %472, %474 : vector<1x256xi1>
    %c1_i32_163 = arith.constant 1 : i32
    %476 = vector.broadcast %c1_i32_163 : i32 to vector<1x256xi32>
    %477 = arith.cmpi sge, %1, %476 : vector<1x256xi32>
    %478 = arith.andi %475, %477 : vector<1x256xi1>
    %c17_i32_164 = arith.constant 17 : i32
    %479 = vector.broadcast %c17_i32_164 : i32 to vector<1x256xi32>
    %480 = arith.cmpi slt, %1, %479 : vector<1x256xi32>
    %481 = arith.andi %478, %480 : vector<1x256xi1>
    %cst_165 = arith.constant 0.000000e+00 : f32
    %482 = vector.shape_cast %481 : vector<1x256xi1> to vector<1x256xi1>
    %483 = vector.broadcast %482 : vector<1x256xi1> to vector<4x256xi1>
    %484 = vector.broadcast %cst_165 : f32 to vector<4x256xf32>
    %485 = arith.select %483, %470, %484 : vector<4x256xi1>, vector<4x256xf32>
    %c224_i32 = arith.constant 224 : i32
    %486 = tpu.dynamic_rotate %13 by %c224_i32 dim 1 : vector<4x256xf32>, i32 -> vector<4x256xf32>
    %c-2_i32_166 = arith.constant -2 : i32
    %487 = vector.broadcast %c-2_i32_166 : i32 to vector<1x256xi32>
    %488 = arith.cmpi sge, %0, %487 : vector<1x256xi32>
    %c14_i32_167 = arith.constant 14 : i32
    %489 = vector.broadcast %c14_i32_167 : i32 to vector<1x256xi32>
    %490 = arith.cmpi slt, %0, %489 : vector<1x256xi32>
    %491 = arith.andi %488, %490 : vector<1x256xi1>
    %c0_i32_168 = arith.constant 0 : i32
    %492 = vector.broadcast %c0_i32_168 : i32 to vector<1x256xi32>
    %493 = arith.cmpi sge, %1, %492 : vector<1x256xi32>
    %494 = arith.andi %491, %493 : vector<1x256xi1>
    %c16_i32_169 = arith.constant 16 : i32
    %495 = vector.broadcast %c16_i32_169 : i32 to vector<1x256xi32>
    %496 = arith.cmpi slt, %1, %495 : vector<1x256xi32>
    %497 = arith.andi %494, %496 : vector<1x256xi1>
    %cst_170 = arith.constant 0.000000e+00 : f32
    %498 = vector.shape_cast %497 : vector<1x256xi1> to vector<1x256xi1>
    %499 = vector.broadcast %498 : vector<1x256xi1> to vector<4x256xi1>
    %500 = vector.broadcast %cst_170 : f32 to vector<4x256xf32>
    %501 = arith.select %499, %486, %500 : vector<4x256xi1>, vector<4x256xf32>
    %c223_i32 = arith.constant 223 : i32
    %502 = tpu.dynamic_rotate %13 by %c223_i32 dim 1 : vector<4x256xf32>, i32 -> vector<4x256xf32>
    %c-2_i32_171 = arith.constant -2 : i32
    %503 = vector.broadcast %c-2_i32_171 : i32 to vector<1x256xi32>
    %504 = arith.cmpi sge, %0, %503 : vector<1x256xi32>
    %c14_i32_172 = arith.constant 14 : i32
    %505 = vector.broadcast %c14_i32_172 : i32 to vector<1x256xi32>
    %506 = arith.cmpi slt, %0, %505 : vector<1x256xi32>
    %507 = arith.andi %504, %506 : vector<1x256xi1>
    %c-1_i32_173 = arith.constant -1 : i32
    %508 = vector.broadcast %c-1_i32_173 : i32 to vector<1x256xi32>
    %509 = arith.cmpi sge, %1, %508 : vector<1x256xi32>
    %510 = arith.andi %507, %509 : vector<1x256xi1>
    %c15_i32_174 = arith.constant 15 : i32
    %511 = vector.broadcast %c15_i32_174 : i32 to vector<1x256xi32>
    %512 = arith.cmpi slt, %1, %511 : vector<1x256xi32>
    %513 = arith.andi %510, %512 : vector<1x256xi1>
    %cst_175 = arith.constant 0.000000e+00 : f32
    %514 = vector.shape_cast %513 : vector<1x256xi1> to vector<1x256xi1>
    %515 = vector.broadcast %514 : vector<1x256xi1> to vector<4x256xi1>
    %516 = vector.broadcast %cst_175 : f32 to vector<4x256xf32>
    %517 = arith.select %515, %502, %516 : vector<4x256xi1>, vector<4x256xf32>
    %c222_i32 = arith.constant 222 : i32
    %518 = tpu.dynamic_rotate %13 by %c222_i32 dim 1 : vector<4x256xf32>, i32 -> vector<4x256xf32>
    %c-2_i32_176 = arith.constant -2 : i32
    %519 = vector.broadcast %c-2_i32_176 : i32 to vector<1x256xi32>
    %520 = arith.cmpi sge, %0, %519 : vector<1x256xi32>
    %c14_i32_177 = arith.constant 14 : i32
    %521 = vector.broadcast %c14_i32_177 : i32 to vector<1x256xi32>
    %522 = arith.cmpi slt, %0, %521 : vector<1x256xi32>
    %523 = arith.andi %520, %522 : vector<1x256xi1>
    %c-2_i32_178 = arith.constant -2 : i32
    %524 = vector.broadcast %c-2_i32_178 : i32 to vector<1x256xi32>
    %525 = arith.cmpi sge, %1, %524 : vector<1x256xi32>
    %526 = arith.andi %523, %525 : vector<1x256xi1>
    %c14_i32_179 = arith.constant 14 : i32
    %527 = vector.broadcast %c14_i32_179 : i32 to vector<1x256xi32>
    %528 = arith.cmpi slt, %1, %527 : vector<1x256xi32>
    %529 = arith.andi %526, %528 : vector<1x256xi1>
    %cst_180 = arith.constant 0.000000e+00 : f32
    %530 = vector.shape_cast %529 : vector<1x256xi1> to vector<1x256xi1>
    %531 = vector.broadcast %530 : vector<1x256xi1> to vector<4x256xi1>
    %532 = vector.broadcast %cst_180 : f32 to vector<4x256xf32>
    %533 = arith.select %531, %518, %532 : vector<4x256xi1>, vector<4x256xf32>
    %534 = tpu.concatenate %165, %181, %197, %213, %229, %245, %261, %277, %293, %309, %325, %341, %13, %357, %373, %389 in 0 : vector<4x256xf32>, vector<4x256xf32>, vector<4x256xf32>, vector<4x256xf32>, vector<4x256xf32>, vector<4x256xf32>, vector<4x256xf32>, vector<4x256xf32>, vector<4x256xf32>, vector<4x256xf32>, vector<4x256xf32>, vector<4x256xf32>, vector<4x256xf32>, vector<4x256xf32>, vector<4x256xf32>, vector<4x256xf32> -> vector<64x256xf32>
    %535 = tpu.concatenate %405, %421, %437, %453, %469, %485, %501, %517, %533 in 0 : vector<4x256xf32>, vector<4x256xf32>, vector<4x256xf32>, vector<4x256xf32>, vector<4x256xf32>, vector<4x256xf32>, vector<4x256xf32>, vector<4x256xf32>, vector<4x256xf32> -> vector<36x256xf32>
    %536 = tpu.concatenate %534, %535 in 0 : vector<64x256xf32>, vector<36x256xf32> -> vector<100x256xf32>
    %c0_181 = arith.constant 0 : index
    %c0_182 = arith.constant 0 : index
    %537 = vector.load %arg7[%c0_181, %c0_182] : memref<8x100xf32, #tpu.memory_space<vmem>>, vector<8x100xf32>
    %cst_183 = arith.constant dense<0.000000e+00> : vector<8x256xf32>
    %538 = tpu.matmul %537, %536, %cst_183 {dimension_numbers = #tpu.dot_dimension_numbers<[1], [0], [0], [1], [0, 0, 1, 1], [], []>} : vector<8x100xf32>, vector<100x256xf32>, vector<8x256xf32> -> vector<8x256xf32>
    %c0_184 = arith.constant 0 : index
    %c0_185 = arith.constant 0 : index
    %539 = vector.load %arg8[%c0_184, %c0_185] : memref<8x1xf32, #tpu.memory_space<vmem>>, vector<8x1xf32>
    %540 = vector.broadcast %539 : vector<8x1xf32> to vector<8x256xf32>
    %541 = arith.addf %538, %540 : vector<8x256xf32>
    %cst_186 = arith.constant 0.000000e+00 : f32
    %542 = vector.broadcast %cst_186 : f32 to vector<8x256xf32>
    %543 = arith.maximumf %541, %542 : vector<8x256xf32>
    %c17_i32_187 = arith.constant 17 : i32
    %544 = tpu.dynamic_rotate %3 by %c17_i32_187 dim 1 : vector<4x256xf32>, i32 -> vector<4x256xf32>
    %c1_i32_188 = arith.constant 1 : i32
    %545 = vector.broadcast %c1_i32_188 : i32 to vector<1x256xi32>
    %546 = arith.cmpi sge, %0, %545 : vector<1x256xi32>
    %c17_i32_189 = arith.constant 17 : i32
    %547 = vector.broadcast %c17_i32_189 : i32 to vector<1x256xi32>
    %548 = arith.cmpi slt, %0, %547 : vector<1x256xi32>
    %549 = arith.andi %546, %548 : vector<1x256xi1>
    %c1_i32_190 = arith.constant 1 : i32
    %550 = vector.broadcast %c1_i32_190 : i32 to vector<1x256xi32>
    %551 = arith.cmpi sge, %1, %550 : vector<1x256xi32>
    %552 = arith.andi %549, %551 : vector<1x256xi1>
    %c17_i32_191 = arith.constant 17 : i32
    %553 = vector.broadcast %c17_i32_191 : i32 to vector<1x256xi32>
    %554 = arith.cmpi slt, %1, %553 : vector<1x256xi32>
    %555 = arith.andi %552, %554 : vector<1x256xi1>
    %cst_192 = arith.constant 0xFF800000 : f32
    %556 = vector.shape_cast %555 : vector<1x256xi1> to vector<1x256xi1>
    %557 = vector.broadcast %556 : vector<1x256xi1> to vector<4x256xi1>
    %558 = vector.broadcast %cst_192 : f32 to vector<4x256xf32>
    %559 = arith.select %557, %544, %558 : vector<4x256xi1>, vector<4x256xf32>
    %560 = arith.maximumf %3, %559 : vector<4x256xf32>
    %c16_i32_193 = arith.constant 16 : i32
    %561 = tpu.dynamic_rotate %3 by %c16_i32_193 dim 1 : vector<4x256xf32>, i32 -> vector<4x256xf32>
    %c1_i32_194 = arith.constant 1 : i32
    %562 = vector.broadcast %c1_i32_194 : i32 to vector<1x256xi32>
    %563 = arith.cmpi sge, %0, %562 : vector<1x256xi32>
    %c17_i32_195 = arith.constant 17 : i32
    %564 = vector.broadcast %c17_i32_195 : i32 to vector<1x256xi32>
    %565 = arith.cmpi slt, %0, %564 : vector<1x256xi32>
    %566 = arith.andi %563, %565 : vector<1x256xi1>
    %c0_i32_196 = arith.constant 0 : i32
    %567 = vector.broadcast %c0_i32_196 : i32 to vector<1x256xi32>
    %568 = arith.cmpi sge, %1, %567 : vector<1x256xi32>
    %569 = arith.andi %566, %568 : vector<1x256xi1>
    %c16_i32_197 = arith.constant 16 : i32
    %570 = vector.broadcast %c16_i32_197 : i32 to vector<1x256xi32>
    %571 = arith.cmpi slt, %1, %570 : vector<1x256xi32>
    %572 = arith.andi %569, %571 : vector<1x256xi1>
    %cst_198 = arith.constant 0xFF800000 : f32
    %573 = vector.shape_cast %572 : vector<1x256xi1> to vector<1x256xi1>
    %574 = vector.broadcast %573 : vector<1x256xi1> to vector<4x256xi1>
    %575 = vector.broadcast %cst_198 : f32 to vector<4x256xf32>
    %576 = arith.select %574, %561, %575 : vector<4x256xi1>, vector<4x256xf32>
    %577 = arith.maximumf %560, %576 : vector<4x256xf32>
    %c15_i32_199 = arith.constant 15 : i32
    %578 = tpu.dynamic_rotate %3 by %c15_i32_199 dim 1 : vector<4x256xf32>, i32 -> vector<4x256xf32>
    %c1_i32_200 = arith.constant 1 : i32
    %579 = vector.broadcast %c1_i32_200 : i32 to vector<1x256xi32>
    %580 = arith.cmpi sge, %0, %579 : vector<1x256xi32>
    %c17_i32_201 = arith.constant 17 : i32
    %581 = vector.broadcast %c17_i32_201 : i32 to vector<1x256xi32>
    %582 = arith.cmpi slt, %0, %581 : vector<1x256xi32>
    %583 = arith.andi %580, %582 : vector<1x256xi1>
    %c-1_i32_202 = arith.constant -1 : i32
    %584 = vector.broadcast %c-1_i32_202 : i32 to vector<1x256xi32>
    %585 = arith.cmpi sge, %1, %584 : vector<1x256xi32>
    %586 = arith.andi %583, %585 : vector<1x256xi1>
    %c15_i32_203 = arith.constant 15 : i32
    %587 = vector.broadcast %c15_i32_203 : i32 to vector<1x256xi32>
    %588 = arith.cmpi slt, %1, %587 : vector<1x256xi32>
    %589 = arith.andi %586, %588 : vector<1x256xi1>
    %cst_204 = arith.constant 0xFF800000 : f32
    %590 = vector.shape_cast %589 : vector<1x256xi1> to vector<1x256xi1>
    %591 = vector.broadcast %590 : vector<1x256xi1> to vector<4x256xi1>
    %592 = vector.broadcast %cst_204 : f32 to vector<4x256xf32>
    %593 = arith.select %591, %578, %592 : vector<4x256xi1>, vector<4x256xf32>
    %594 = arith.maximumf %577, %593 : vector<4x256xf32>
    %c1_i32_205 = arith.constant 1 : i32
    %595 = tpu.dynamic_rotate %3 by %c1_i32_205 dim 1 : vector<4x256xf32>, i32 -> vector<4x256xf32>
    %c0_i32_206 = arith.constant 0 : i32
    %596 = vector.broadcast %c0_i32_206 : i32 to vector<1x256xi32>
    %597 = arith.cmpi sge, %0, %596 : vector<1x256xi32>
    %c16_i32_207 = arith.constant 16 : i32
    %598 = vector.broadcast %c16_i32_207 : i32 to vector<1x256xi32>
    %599 = arith.cmpi slt, %0, %598 : vector<1x256xi32>
    %600 = arith.andi %597, %599 : vector<1x256xi1>
    %c1_i32_208 = arith.constant 1 : i32
    %601 = vector.broadcast %c1_i32_208 : i32 to vector<1x256xi32>
    %602 = arith.cmpi sge, %1, %601 : vector<1x256xi32>
    %603 = arith.andi %600, %602 : vector<1x256xi1>
    %c17_i32_209 = arith.constant 17 : i32
    %604 = vector.broadcast %c17_i32_209 : i32 to vector<1x256xi32>
    %605 = arith.cmpi slt, %1, %604 : vector<1x256xi32>
    %606 = arith.andi %603, %605 : vector<1x256xi1>
    %cst_210 = arith.constant 0xFF800000 : f32
    %607 = vector.shape_cast %606 : vector<1x256xi1> to vector<1x256xi1>
    %608 = vector.broadcast %607 : vector<1x256xi1> to vector<4x256xi1>
    %609 = vector.broadcast %cst_210 : f32 to vector<4x256xf32>
    %610 = arith.select %608, %595, %609 : vector<4x256xi1>, vector<4x256xf32>
    %611 = arith.maximumf %594, %610 : vector<4x256xf32>
    %c255_i32_211 = arith.constant 255 : i32
    %612 = tpu.dynamic_rotate %3 by %c255_i32_211 dim 1 : vector<4x256xf32>, i32 -> vector<4x256xf32>
    %c0_i32_212 = arith.constant 0 : i32
    %613 = vector.broadcast %c0_i32_212 : i32 to vector<1x256xi32>
    %614 = arith.cmpi sge, %0, %613 : vector<1x256xi32>
    %c16_i32_213 = arith.constant 16 : i32
    %615 = vector.broadcast %c16_i32_213 : i32 to vector<1x256xi32>
    %616 = arith.cmpi slt, %0, %615 : vector<1x256xi32>
    %617 = arith.andi %614, %616 : vector<1x256xi1>
    %c-1_i32_214 = arith.constant -1 : i32
    %618 = vector.broadcast %c-1_i32_214 : i32 to vector<1x256xi32>
    %619 = arith.cmpi sge, %1, %618 : vector<1x256xi32>
    %620 = arith.andi %617, %619 : vector<1x256xi1>
    %c15_i32_215 = arith.constant 15 : i32
    %621 = vector.broadcast %c15_i32_215 : i32 to vector<1x256xi32>
    %622 = arith.cmpi slt, %1, %621 : vector<1x256xi32>
    %623 = arith.andi %620, %622 : vector<1x256xi1>
    %cst_216 = arith.constant 0xFF800000 : f32
    %624 = vector.shape_cast %623 : vector<1x256xi1> to vector<1x256xi1>
    %625 = vector.broadcast %624 : vector<1x256xi1> to vector<4x256xi1>
    %626 = vector.broadcast %cst_216 : f32 to vector<4x256xf32>
    %627 = arith.select %625, %612, %626 : vector<4x256xi1>, vector<4x256xf32>
    %628 = arith.maximumf %611, %627 : vector<4x256xf32>
    %c241_i32_217 = arith.constant 241 : i32
    %629 = tpu.dynamic_rotate %3 by %c241_i32_217 dim 1 : vector<4x256xf32>, i32 -> vector<4x256xf32>
    %c-1_i32_218 = arith.constant -1 : i32
    %630 = vector.broadcast %c-1_i32_218 : i32 to vector<1x256xi32>
    %631 = arith.cmpi sge, %0, %630 : vector<1x256xi32>
    %c15_i32_219 = arith.constant 15 : i32
    %632 = vector.broadcast %c15_i32_219 : i32 to vector<1x256xi32>
    %633 = arith.cmpi slt, %0, %632 : vector<1x256xi32>
    %634 = arith.andi %631, %633 : vector<1x256xi1>
    %c1_i32_220 = arith.constant 1 : i32
    %635 = vector.broadcast %c1_i32_220 : i32 to vector<1x256xi32>
    %636 = arith.cmpi sge, %1, %635 : vector<1x256xi32>
    %637 = arith.andi %634, %636 : vector<1x256xi1>
    %c17_i32_221 = arith.constant 17 : i32
    %638 = vector.broadcast %c17_i32_221 : i32 to vector<1x256xi32>
    %639 = arith.cmpi slt, %1, %638 : vector<1x256xi32>
    %640 = arith.andi %637, %639 : vector<1x256xi1>
    %cst_222 = arith.constant 0xFF800000 : f32
    %641 = vector.shape_cast %640 : vector<1x256xi1> to vector<1x256xi1>
    %642 = vector.broadcast %641 : vector<1x256xi1> to vector<4x256xi1>
    %643 = vector.broadcast %cst_222 : f32 to vector<4x256xf32>
    %644 = arith.select %642, %629, %643 : vector<4x256xi1>, vector<4x256xf32>
    %645 = arith.maximumf %628, %644 : vector<4x256xf32>
    %c240_i32_223 = arith.constant 240 : i32
    %646 = tpu.dynamic_rotate %3 by %c240_i32_223 dim 1 : vector<4x256xf32>, i32 -> vector<4x256xf32>
    %c-1_i32_224 = arith.constant -1 : i32
    %647 = vector.broadcast %c-1_i32_224 : i32 to vector<1x256xi32>
    %648 = arith.cmpi sge, %0, %647 : vector<1x256xi32>
    %c15_i32_225 = arith.constant 15 : i32
    %649 = vector.broadcast %c15_i32_225 : i32 to vector<1x256xi32>
    %650 = arith.cmpi slt, %0, %649 : vector<1x256xi32>
    %651 = arith.andi %648, %650 : vector<1x256xi1>
    %c0_i32_226 = arith.constant 0 : i32
    %652 = vector.broadcast %c0_i32_226 : i32 to vector<1x256xi32>
    %653 = arith.cmpi sge, %1, %652 : vector<1x256xi32>
    %654 = arith.andi %651, %653 : vector<1x256xi1>
    %c16_i32_227 = arith.constant 16 : i32
    %655 = vector.broadcast %c16_i32_227 : i32 to vector<1x256xi32>
    %656 = arith.cmpi slt, %1, %655 : vector<1x256xi32>
    %657 = arith.andi %654, %656 : vector<1x256xi1>
    %cst_228 = arith.constant 0xFF800000 : f32
    %658 = vector.shape_cast %657 : vector<1x256xi1> to vector<1x256xi1>
    %659 = vector.broadcast %658 : vector<1x256xi1> to vector<4x256xi1>
    %660 = vector.broadcast %cst_228 : f32 to vector<4x256xf32>
    %661 = arith.select %659, %646, %660 : vector<4x256xi1>, vector<4x256xf32>
    %662 = arith.maximumf %645, %661 : vector<4x256xf32>
    %c239_i32_229 = arith.constant 239 : i32
    %663 = tpu.dynamic_rotate %3 by %c239_i32_229 dim 1 : vector<4x256xf32>, i32 -> vector<4x256xf32>
    %c-1_i32_230 = arith.constant -1 : i32
    %664 = vector.broadcast %c-1_i32_230 : i32 to vector<1x256xi32>
    %665 = arith.cmpi sge, %0, %664 : vector<1x256xi32>
    %c15_i32_231 = arith.constant 15 : i32
    %666 = vector.broadcast %c15_i32_231 : i32 to vector<1x256xi32>
    %667 = arith.cmpi slt, %0, %666 : vector<1x256xi32>
    %668 = arith.andi %665, %667 : vector<1x256xi1>
    %c-1_i32_232 = arith.constant -1 : i32
    %669 = vector.broadcast %c-1_i32_232 : i32 to vector<1x256xi32>
    %670 = arith.cmpi sge, %1, %669 : vector<1x256xi32>
    %671 = arith.andi %668, %670 : vector<1x256xi1>
    %c15_i32_233 = arith.constant 15 : i32
    %672 = vector.broadcast %c15_i32_233 : i32 to vector<1x256xi32>
    %673 = arith.cmpi slt, %1, %672 : vector<1x256xi32>
    %674 = arith.andi %671, %673 : vector<1x256xi1>
    %cst_234 = arith.constant 0xFF800000 : f32
    %675 = vector.shape_cast %674 : vector<1x256xi1> to vector<1x256xi1>
    %676 = vector.broadcast %675 : vector<1x256xi1> to vector<4x256xi1>
    %677 = vector.broadcast %cst_234 : f32 to vector<4x256xf32>
    %678 = arith.select %676, %663, %677 : vector<4x256xi1>, vector<4x256xf32>
    %679 = arith.maximumf %662, %678 : vector<4x256xf32>
    %c0_235 = arith.constant 0 : index
    %c0_236 = arith.constant 0 : index
    %680 = vector.load %arg9[%c0_235, %c0_236] : memref<8x4xf32, #tpu.memory_space<vmem>>, vector<8x4xf32>
    %cst_237 = arith.constant dense<0.000000e+00> : vector<8x256xf32>
    %681 = tpu.matmul %680, %679, %cst_237 {dimension_numbers = #tpu.dot_dimension_numbers<[1], [0], [0], [1], [0, 0, 1, 1], [], []>} : vector<8x4xf32>, vector<4x256xf32>, vector<8x256xf32> -> vector<8x256xf32>
    %c0_238 = arith.constant 0 : index
    %c0_239 = arith.constant 0 : index
    %682 = vector.load %arg10[%c0_238, %c0_239] : memref<8x1xf32, #tpu.memory_space<vmem>>, vector<8x1xf32>
    %683 = vector.broadcast %682 : vector<8x1xf32> to vector<8x256xf32>
    %684 = arith.addf %681, %683 : vector<8x256xf32>
    %cst_240 = arith.constant 0.000000e+00 : f32
    %685 = vector.broadcast %cst_240 : f32 to vector<8x256xf32>
    %686 = arith.maximumf %684, %685 : vector<8x256xf32>
    %687 = tpu.concatenate %11, %149, %543, %686 in 0 : vector<8x256xf32>, vector<8x256xf32>, vector<8x256xf32>, vector<8x256xf32> -> vector<32x256xf32>
    %c0_241 = arith.constant 0 : index
    %c0_242 = arith.constant 0 : index
    %c0_243 = arith.constant 0 : index
    %688 = vector.load %arg11[%c0_241, %c0_242, %c0_243] : memref<1x32x256xf32, #tpu.memory_space<vmem>>, vector<1x32x256xf32>
    %689 = vector.shape_cast %688 : vector<1x32x256xf32> to vector<32x256xf32>
    %690 = vector.shape_cast %687 : vector<32x256xf32> to vector<1x32x256xf32>
    tpu.vector_store %arg11[%c0_241, %c0_242, %c0_243], %690 {strides = array<i32>} : memref<1x32x256xf32, #tpu.memory_space<vmem>>, vector<1x32x256xf32>,
    return
  }
  func.func @transform_0(%arg0: i32) -> (i32, i32) {
    %c0_i32 = arith.constant 0 : i32
    %c0_i32_0 = arith.constant 0 : i32
    %c0_i32_1 = arith.constant 0 : i32
    return %c0_i32, %c0_i32_0 : i32, i32
  }
  func.func @transform_1(%arg0: i32) -> (i32, i32, i32) {
    %c0_i32 = arith.constant 0 : i32
    %c0_i32_0 = arith.constant 0 : i32
    %c0_i32_1 = arith.constant 0 : i32
    return %arg0, %c0_i32, %c0_i32_0 : i32, i32, i32
  }
  func.func @transform_2(%arg0: i32) -> (i32, i32) {
    %c0_i32 = arith.constant 0 : i32
    %c0_i32_0 = arith.constant 0 : i32
    %c0_i32_1 = arith.constant 0 : i32
    return %c0_i32, %c0_i32_0 : i32, i32
  }
  func.func @transform_3(%arg0: i32) -> (i32, i32) {
    %c0_i32 = arith.constant 0 : i32
    %c0_i32_0 = arith.constant 0 : i32
    %c0_i32_1 = arith.constant 0 : i32
    return %c0_i32, %c0_i32_0 : i32, i32
  }
  func.func @transform_4(%arg0: i32) -> (i32, i32) {
    %c0_i32 = arith.constant 0 : i32
    %c0_i32_0 = arith.constant 0 : i32
    %c0_i32_1 = arith.constant 0 : i32
    return %c0_i32, %c0_i32_0 : i32, i32
  }
  func.func @transform_5(%arg0: i32) -> (i32, i32) {
    %c0_i32 = arith.constant 0 : i32
    %c0_i32_0 = arith.constant 0 : i32
    %c0_i32_1 = arith.constant 0 : i32
    return %c0_i32, %c0_i32_0 : i32, i32
  }
  func.func @transform_6(%arg0: i32) -> (i32, i32) {
    %c0_i32 = arith.constant 0 : i32
    %c0_i32_0 = arith.constant 0 : i32
    %c0_i32_1 = arith.constant 0 : i32
    return %c0_i32, %c0_i32_0 : i32, i32
  }
  func.func @transform_7(%arg0: i32) -> (i32, i32) {
    %c0_i32 = arith.constant 0 : i32
    %c0_i32_0 = arith.constant 0 : i32
    %c0_i32_1 = arith.constant 0 : i32
    return %c0_i32, %c0_i32_0 : i32, i32
  }
  func.func @transform_8(%arg0: i32) -> (i32, i32) {
    %c0_i32 = arith.constant 0 : i32
    %c0_i32_0 = arith.constant 0 : i32
    %c0_i32_1 = arith.constant 0 : i32
    return %c0_i32, %c0_i32_0 : i32, i32
  }
  func.func @transform_9(%arg0: i32) -> (i32, i32) {
    %c0_i32 = arith.constant 0 : i32
    %c0_i32_0 = arith.constant 0 : i32
    %c0_i32_1 = arith.constant 0 : i32
    return %c0_i32, %c0_i32_0 : i32, i32
  }
  func.func @transform_10(%arg0: i32) -> (i32, i32, i32) {
    %c0_i32 = arith.constant 0 : i32
    %c0_i32_0 = arith.constant 0 : i32
    %c0_i32_1 = arith.constant 0 : i32
    return %arg0, %c0_i32, %c0_i32_0 : i32, i32, i32
  }
}

</mosaic_0001>

<llo_original>
// kernel: tile.9
$region0: #{tile.9}
  %s0 = inlined_call_operand.vmem [shape: s32[16,16], index: 0, kind: input, shape index: {}]
  %s1 = inlined_call_operand.vmem [shape: s32[1,256], index: 1, kind: output, shape index: {}]
  $region1: #{tile.9} parent=0
    #allocation0 [shape = 'u8[8192]{0}', space=vmem, size = 0x2000, scoped, tag = 'scoped mem for output reshape']
    %s2 = smov 3
    %v3 = vld [vmem:[%s0] ss:$8 sm:%s2]
    %vm4 = vcmask 130048
    %5 = vst.msk [vmem:[#allocation0] ss:$8 sm:$0x3] %vm4, %v3
    %s6 = scalar_lea.vmem %s0, 7
    %s7 = smov 3
    %v8 = vld [vmem:[%s6] ss:$8 sm:%s7]
    %9 = vrot.lane.b32.xlu0 %v8, 112
    %v10 = vpop.permute.xlu0 %9
    %vm11 = vcmask 1048448
    %12 = vst.msk [vmem:[#allocation0] ss:$8 sm:$0x3] %vm11, %v10
    %s13 = scalar_lea.vmem %s0, 6
    %s14 = smov 3
    %v15 = vld [vmem:[%s13] ss:$8 sm:%s14]
    %16 = vrot.lane.b32.xlu0 %v15, 96
    %v17 = vpop.permute.xlu0 %16
    %vm18 = vcmask 917248
    %19 = vst.msk [vmem:[#allocation0] ss:$8 sm:$0x3] %vm18, %v17
    %s20 = scalar_lea.vmem %s0, 5
    %s21 = smov 3
    %v22 = vld [vmem:[%s20] ss:$8 sm:%s21]
    %23 = vrot.lane.b32.xlu0 %v22, 80
    %v24 = vpop.permute.xlu0 %23
    %vm25 = vcmask 786048
    %26 = vst.msk [vmem:[#allocation0] ss:$8 sm:$0x3] %vm25, %v24
    %s27 = scalar_lea.vmem %s0, 4
    %s28 = smov 3
    %v29 = vld [vmem:[%s27] ss:$8 sm:%s28]
    %30 = vrot.lane.b32.xlu0 %v29, 64
    %v31 = vpop.permute.xlu0 %30
    %vm32 = vcmask 654848
    %33 = vst.msk [vmem:[#allocation0] ss:$8 sm:$0x3] %vm32, %v31
    %s34 = scalar_lea.vmem %s0, 3
    %s35 = smov 3
    %v36 = vld [vmem:[%s34] ss:$8 sm:%s35]
    %37 = vrot.lane.b32.xlu0 %v36, 48
    %v38 = vpop.permute.xlu0 %37
    %vm39 = vcmask 523648
    %40 = vst.msk [vmem:[#allocation0] ss:$8 sm:$0x3] %vm39, %v38
    %s41 = scalar_lea.vmem %s0, 2
    %s42 = smov 3
    %v43 = vld [vmem:[%s41] ss:$8 sm:%s42]
    %44 = vrot.lane.b32.xlu0 %v43, 32
    %v45 = vpop.permute.xlu0 %44
    %vm46 = vcmask 392448
    %47 = vst.msk [vmem:[#allocation0] ss:$8 sm:$0x3] %vm46, %v45
    %s48 = scalar_lea.vmem %s0, 1
    %s49 = smov 3
    %v50 = vld [vmem:[%s48] ss:$8 sm:%s49]
    %51 = vrot.lane.b32.xlu0 %v50, 16
    %v52 = vpop.permute.xlu0 %51
    %vm53 = vcmask 261248
    %54 = vst.msk [vmem:[#allocation0] ss:$8 sm:$0x3] %vm53, %v52
    %s56 = sshllo.u32 0, 1
    %v58 = vld [vmem:[#allocation0] sm:%s56]
    %s59 = sshllo.u32 0, 1
    %60 = vst [vmem:[%s1] sm:%s59] %v58
    %s61 = scalar_lea.vmem [#allocation0], 8
    %v62 = vld [vmem:[%s61] sm:%s56]
    %s63 = sshllo.u32 0, 1
    %s64 = scalar_lea.vmem %s1, 1
    %65 = vst [vmem:[%s64] sm:%s63] %v62

// kernel: inception_forward.1
$region0: #{inception_forward.1}
  #allocation0 [shape = 'u32[]', space=smem, size = 0x4, offset = 0x4, fixed_abs, tag = 'smem constant byte address 0x4 - core index']
  #allocation1 [shape = 'u32[144,128]{1,0:T(1,128)}', space=vmem, size = 0x12000, scoped, tag = 'internal scratch']
  %s0 = inlined_call_operand.vmem [shape: s32[2,256], index: 0, kind: input, shape index: {}]
  %s1 = inlined_call_operand.vmem [shape: f32[2,4,256], index: 1, kind: input, shape index: {}]
  %s2 = inlined_call_operand.vmem [shape: f32[16,4], index: 2, kind: input, shape index: {}]
  %s3 = inlined_call_operand.vmem [shape: f32[16,1], index: 3, kind: input, shape index: {}]
  %s4 = inlined_call_operand.vmem [shape: f32[8,36], index: 4, kind: input, shape index: {}]
  %s5 = inlined_call_operand.vmem [shape: f32[8,1], index: 5, kind: input, shape index: {}]
  %s6 = inlined_call_operand.vmem [shape: f32[8,100], index: 6, kind: input, shape index: {}]
  %s7 = inlined_call_operand.vmem [shape: f32[8,1], index: 7, kind: input, shape index: {}]
  %s8 = inlined_call_operand.vmem [shape: f32[8,4], index: 8, kind: input, shape index: {}]
  %s9 = inlined_call_operand.vmem [shape: f32[8,1], index: 9, kind: input, shape index: {}]
  %s10 = inlined_call_operand.vmem [shape: f32[2,32,256], index: 10, kind: output, shape index: {}]
  %s11 = sld [smem:[#allocation0]]
  $region73: #{inception_forward.1} parent=0
    _
  %s13 = ssub.s32 1, %s11
  %s14 = scalar_select 0, %s13, %s11
  loop: start=0, step=1, limit=4
  $region2: #{inception_forward.1} parent=0 // loop_pre_header
    _
  $region3: #{inception_forward.1} parent=0 // loop_header
    %s16 = sphi 0, %s20
    %p17 = scmp.ge.s32.totalorder %s16, 4
    %s24 = sphi 0, %s24
    %s26 = sphi 0, %s24
    %s27 = sphi 0, %s26
    %s41 = sphi 0, %s27
    %s47 = sphi 0, %s49
    %s50 = sphi 0, %s47
    %s51 = sphi 0, %s50
    %s67 = sphi 0, %s51
    %s71 = sphi 0, %s71
    %s73 = sphi 0, %s71
    %s74 = sphi 0, %s73
    %s88 = sphi 0, %s74
    %s92 = sphi 0, %s92
    %s94 = sphi 0, %s92
    %s95 = sphi 0, %s94
    %s109 = sphi 0, %s95
    %s113 = sphi 0, %s113
    %s115 = sphi 0, %s113
    %s116 = sphi 0, %s115
    %s130 = sphi 0, %s116
    %s134 = sphi 0, %s134
    %s136 = sphi 0, %s134
    %s137 = sphi 0, %s136
    %s151 = sphi 0, %s137
    %s155 = sphi 0, %s155
    %s157 = sphi 0, %s155
    %s158 = sphi 0, %s157
    %s172 = sphi 0, %s158
    %s176 = sphi 0, %s176
    %s178 = sphi 0, %s176
    %s179 = sphi 0, %s178
    %s193 = sphi 0, %s179
    %s197 = sphi 0, %s197
    %s199 = sphi 0, %s197
    %s200 = sphi 0, %s199
    %s214 = sphi 0, %s200
    %s218 = sphi 0, %s218
    %s220 = sphi 0, %s218
    %s221 = sphi 0, %s220
    %s235 = sphi 0, %s221
    %s241 = sphi 0, %s243
    %s244 = sphi 0, %s241
    %s245 = sphi 0, %s244
    %s261 = sphi 0, %s245
  $region4: #{inception_forward.1} parent=0 // loop_header_branch
    %19 = sbr.rel (%p17) target = $region8
  $region5: #{inception_forward.1} parent=0 // loop_body
    %s21 = ssub.s32 %s16, 1
    %s22 = ssub.s32 %s16, 2
    %s23 = sadd.s32 %s16, 1
    %s25 = sadd.s32 %s24, 1
    %p28 = scmp.eq.s32.totalorder %s16, 1
    %p29 = scmp.ne.s32.totalorder %s24, %s26
    %p30 = scmp.eq.s32.totalorder %s16, 0
    %p31 = por %p29, %p30
    %p32 = scmp.ne.s32.totalorder %s24, %s26
    %p33 = scmp.eq.s32.totalorder %s21, 1
    %p34 = por %p32, %p33
    %p35 = scmp.ne.s32.totalorder %s26, %s27
    %p36 = scmp.eq.s32.totalorder %s21, 0
    %p37 = por %p35, %p36
    %p38 = scmp.ne.s32.totalorder %s26, %s27
    %p39 = scmp.eq.s32.totalorder %s22, 1
    %p40 = por %p38, %p39
    %p42 = scmp.ne.s32.totalorder %s27, %s41
    %p43 = scmp.eq.s32.totalorder %s22, 0
    %p44 = por %p42, %p43
    %s45 = ssub.s32 %s16, %s23
    %p46 = scmp.eq.s32.totalorder %s45, 0
    %s48 = sadd.s32 %s47, 1
    %s49 = scalar_select %p46, %s47, %s48
    %p52 = pneg %p46
    %p53 = scmp.eq.s32.totalorder %s16, 1
    %p54 = por %p52, %p53
    %p55 = scmp.ne.s32.totalorder %s47, %s50
    %p56 = scmp.eq.s32.totalorder %s16, 0
    %p57 = por %p55, %p56
    %p58 = scmp.ne.s32.totalorder %s47, %s50
    %p59 = scmp.eq.s32.totalorder %s21, 1
    %p60 = por %p58, %p59
    %p61 = scmp.ne.s32.totalorder %s50, %s51
    %p62 = scmp.eq.s32.totalorder %s21, 0
    %p63 = por %p61, %p62
    %p64 = scmp.ne.s32.totalorder %s50, %s51
    %p65 = scmp.eq.s32.totalorder %s22, 1
    %p66 = por %p64, %p65
    %p68 = scmp.ne.s32.totalorder %s51, %s67
    %p69 = scmp.eq.s32.totalorder %s22, 0
    %p70 = por %p68, %p69
    %s72 = sadd.s32 %s71, 1
    %p75 = scmp.eq.s32.totalorder %s16, 1
    %p76 = scmp.ne.s32.totalorder %s71, %s73
    %p77 = scmp.eq.s32.totalorder %s16, 0
    %p78 = por %p76, %p77
    %p79 = scmp.ne.s32.totalorder %s71, %s73
    %p80 = scmp.eq.s32.totalorder %s21, 1
    %p81 = por %p79, %p80
    %p82 = scmp.ne.s32.totalorder %s73, %s74
    %p83 = scmp.eq.s32.totalorder %s21, 0
    %p84 = por %p82, %p83
    %p85 = scmp.ne.s32.totalorder %s73, %s74
    %p86 = scmp.eq.s32.totalorder %s22, 1
    %p87 = por %p85, %p86
    %p89 = scmp.ne.s32.totalorder %s74, %s88
    %p90 = scmp.eq.s32.totalorder %s22, 0
    %p91 = por %p89, %p90
    %s93 = sadd.s32 %s92, 1
    %p96 = scmp.eq.s32.totalorder %s16, 1
    %p97 = scmp.ne.s32.totalorder %s92, %s94
    %p98 = scmp.eq.s32.totalorder %s16, 0
    %p99 = por %p97, %p98
    %p100 = scmp.ne.s32.totalorder %s92, %s94
    %p101 = scmp.eq.s32.totalorder %s21, 1
    %p102 = por %p100, %p101
    %p103 = scmp.ne.s32.totalorder %s94, %s95
    %p104 = scmp.eq.s32.totalorder %s21, 0
    %p105 = por %p103, %p104
    %p106 = scmp.ne.s32.totalorder %s94, %s95
    %p107 = scmp.eq.s32.totalorder %s22, 1
    %p108 = por %p106, %p107
    %p110 = scmp.ne.s32.totalorder %s95, %s109
    %p111 = scmp.eq.s32.totalorder %s22, 0
    %p112 = por %p110, %p111
    %s114 = sadd.s32 %s113, 1
    %p117 = scmp.eq.s32.totalorder %s16, 1
    %p118 = scmp.ne.s32.totalorder %s113, %s115
    %p119 = scmp.eq.s32.totalorder %s16, 0
    %p120 = por %p118, %p119
    %p121 = scmp.ne.s32.totalorder %s113, %s115
    %p122 = scmp.eq.s32.totalorder %s21, 1
    %p123 = por %p121, %p122
    %p124 = scmp.ne.s32.totalorder %s115, %s116
    %p125 = scmp.eq.s32.totalorder %s21, 0
    %p126 = por %p124, %p125
    %p127 = scmp.ne.s32.totalorder %s115, %s116
    %p128 = scmp.eq.s32.totalorder %s22, 1
    %p129 = por %p127, %p128
    %p131 = scmp.ne.s32.totalorder %s116, %s130
    %p132 = scmp.eq.s32.totalorder %s22, 0
    %p133 = por %p131, %p132
    %s135 = sadd.s32 %s134, 1
    %p138 = scmp.eq.s32.totalorder %s16, 1
    %p139 = scmp.ne.s32.totalorder %s134, %s136
    %p140 = scmp.eq.s32.totalorder %s16, 0
    %p141 = por %p139, %p140
    %p142 = scmp.ne.s32.totalorder %s134, %s136
    %p143 = scmp.eq.s32.totalorder %s21, 1
    %p144 = por %p142, %p143
    %p145 = scmp.ne.s32.totalorder %s136, %s137
    %p146 = scmp.eq.s32.totalorder %s21, 0
    %p147 = por %p145, %p146
    %p148 = scmp.ne.s32.totalorder %s136, %s137
    %p149 = scmp.eq.s32.totalorder %s22, 1
    %p150 = por %p148, %p149
    %p152 = scmp.ne.s32.totalorder %s137, %s151
    %p153 = scmp.eq.s32.totalorder %s22, 0
    %p154 = por %p152, %p153
    %s156 = sadd.s32 %s155, 1
    %p159 = scmp.eq.s32.totalorder %s16, 1
    %p160 = scmp.ne.s32.totalorder %s155, %s157
    %p161 = scmp.eq.s32.totalorder %s16, 0
    %p162 = por %p160, %p161
    %p163 = scmp.ne.s32.totalorder %s155, %s157
    %p164 = scmp.eq.s32.totalorder %s21, 1
    %p165 = por %p163, %p164
    %p166 = scmp.ne.s32.totalorder %s157, %s158
    %p167 = scmp.eq.s32.totalorder %s21, 0
    %p168 = por %p166, %p167
    %p169 = scmp.ne.s32.totalorder %s157, %s158
    %p170 = scmp.eq.s32.totalorder %s22, 1
    %p171 = por %p169, %p170
    %p173 = scmp.ne.s32.totalorder %s158, %s172
    %p174 = scmp.eq.s32.totalorder %s22, 0
    %p175 = por %p173, %p174
    %s177 = sadd.s32 %s176, 1
    %p180 = scmp.eq.s32.totalorder %s16, 1
    %p181 = scmp.ne.s32.totalorder %s176, %s178
    %p182 = scmp.eq.s32.totalorder %s16, 0
    %p183 = por %p181, %p182
    %p184 = scmp.ne.s32.totalorder %s176, %s178
    %p185 = scmp.eq.s32.totalorder %s21, 1
    %p186 = por %p184, %p185
    %p187 = scmp.ne.s32.totalorder %s178, %s179
    %p188 = scmp.eq.s32.totalorder %s21, 0
    %p189 = por %p187, %p188
    %p190 = scmp.ne.s32.totalorder %s178, %s179
    %p191 = scmp.eq.s32.totalorder %s22, 1
    %p192 = por %p190, %p191
    %p194 = scmp.ne.s32.totalorder %s179, %s193
    %p195 = scmp.eq.s32.totalorder %s22, 0
    %p196 = por %p194, %p195
    %s198 = sadd.s32 %s197, 1
    %p201 = scmp.eq.s32.totalorder %s16, 1
    %p202 = scmp.ne.s32.totalorder %s197, %s199
    %p203 = scmp.eq.s32.totalorder %s16, 0
    %p204 = por %p202, %p203
    %p205 = scmp.ne.s32.totalorder %s197, %s199
    %p206 = scmp.eq.s32.totalorder %s21, 1
    %p207 = por %p205, %p206
    %p208 = scmp.ne.s32.totalorder %s199, %s200
    %p209 = scmp.eq.s32.totalorder %s21, 0
    %p210 = por %p208, %p209
    %p211 = scmp.ne.s32.totalorder %s199, %s200
    %p212 = scmp.eq.s32.totalorder %s22, 1
    %p213 = por %p211, %p212
    %p215 = scmp.ne.s32.totalorder %s200, %s214
    %p216 = scmp.eq.s32.totalorder %s22, 0
    %p217 = por %p215, %p216
    %s219 = sadd.s32 %s218, 1
    %p222 = scmp.eq.s32.totalorder %s16, 1
    %p223 = scmp.ne.s32.totalorder %s218, %s220
    %p224 = scmp.eq.s32.totalorder %s16, 0
    %p225 = por %p223, %p224
    %p226 = scmp.ne.s32.totalorder %s218, %s220
    %p227 = scmp.eq.s32.totalorder %s21, 1
    %p228 = por %p226, %p227
    %p229 = scmp.ne.s32.totalorder %s220, %s221
    %p230 = scmp.eq.s32.totalorder %s21, 0
    %p231 = por %p229, %p230
    %p232 = scmp.ne.s32.totalorder %s220, %s221
    %p233 = scmp.eq.s32.totalorder %s22, 1
    %p234 = por %p232, %p233
    %p236 = scmp.ne.s32.totalorder %s221, %s235
    %p237 = scmp.eq.s32.totalorder %s22, 0
    %p238 = por %p236, %p237
    %s239 = ssub.s32 %s16, %s23
    %p240 = scmp.eq.s32.totalorder %s239, 0
    %s242 = sadd.s32 %s241, 1
    %s243 = scalar_select %p240, %s241, %s242
    %p246 = pneg %p240
    %p247 = scmp.eq.s32.totalorder %s16, 1
    %p248 = por %p246, %p247
    %p249 = scmp.ne.s32.totalorder %s241, %s244
    %p250 = scmp.eq.s32.totalorder %s16, 0
    %p251 = por %p249, %p250
    %p252 = scmp.ne.s32.totalorder %s241, %s244
    %p253 = scmp.eq.s32.totalorder %s21, 1
    %p254 = por %p252, %p253
    %p255 = scmp.ne.s32.totalorder %s244, %s245
    %p256 = scmp.eq.s32.totalorder %s21, 0
    %p257 = por %p255, %p256
    %p258 = scmp.ne.s32.totalorder %s244, %s245
    %p259 = scmp.eq.s32.totalorder %s22, 1
    %p260 = por %p258, %p259
    %p262 = scmp.ne.s32.totalorder %s245, %s261
    %p263 = scmp.eq.s32.totalorder %s22, 0
    %p264 = por %p262, %p263
    %p265 = scmp.le.s32.totalorder 1, %s16
    %p266 = scmp.lt.s32.totalorder %s16, 3
    %p267 = pnand %p265, %p266
    %p268 = pneg %p267
    // Predicated region
    $region9: #{inception_forward.1} parent=5 // pred_check
      _
    $region10: #{inception_forward.1} parent=5 // pred_check_branch
      %270 = sbr.rel (%p267) target = $region12
    $region11: #{inception_forward.1} parent=5 // pred_region
      %s271 = ssub.s32 %s16, 1
      // Predicated region
      $region13: #{inception_forward.1} parent=11 // pred_check
        %p272 = pneg %p37
      $region14: #{inception_forward.1} parent=11 // pred_check_branch
        %274 = sbr.rel (%p272) target = $region16
      $region15: #{inception_forward.1} parent=11 // pred_region
        _
      $region16: #{inception_forward.1} parent=11 // pred_fallthru
        _
      // Predicated region
      $region17: #{inception_forward.1} parent=11 // pred_check
        %p275 = pneg %p84
      $region18: #{inception_forward.1} parent=11 // pred_check_branch
        %277 = sbr.rel (%p275) target = $region20
      $region19: #{inception_forward.1} parent=11 // pred_region
        _
      $region20: #{inception_forward.1} parent=11 // pred_fallthru
        _
      // Predicated region
      $region21: #{inception_forward.1} parent=11 // pred_check
        %p278 = pneg %p105
      $region22: #{inception_forward.1} parent=11 // pred_check_branch
        %280 = sbr.rel (%p278) target = $region24
      $region23: #{inception_forward.1} parent=11 // pred_region
        _
      $region24: #{inception_forward.1} parent=11 // pred_fallthru
        _
      // Predicated region
      $region25: #{inception_forward.1} parent=11 // pred_check
        %p281 = pneg %p126
      $region26: #{inception_forward.1} parent=11 // pred_check_branch
        %283 = sbr.rel (%p281) target = $region28
      $region27: #{inception_forward.1} parent=11 // pred_region
        _
      $region28: #{inception_forward.1} parent=11 // pred_fallthru
        _
      // Predicated region
      $region29: #{inception_forward.1} parent=11 // pred_check
        %p284 = pneg %p147
      $region30: #{inception_forward.1} parent=11 // pred_check_branch
        %286 = sbr.rel (%p284) target = $region32
      $region31: #{inception_forward.1} parent=11 // pred_region
        _
      $region32: #{inception_forward.1} parent=11 // pred_fallthru
        _
      // Predicated region
      $region33: #{inception_forward.1} parent=11 // pred_check
        %p287 = pneg %p168
      $region34: #{inception_forward.1} parent=11 // pred_check_branch
        %289 = sbr.rel (%p287) target = $region36
      $region35: #{inception_forward.1} parent=11 // pred_region
        _
      $region36: #{inception_forward.1} parent=11 // pred_fallthru
        _
      // Predicated region
      $region37: #{inception_forward.1} parent=11 // pred_check
        %p290 = pneg %p189
      $region38: #{inception_forward.1} parent=11 // pred_check_branch
        %292 = sbr.rel (%p290) target = $region40
      $region39: #{inception_forward.1} parent=11 // pred_region
        _
      $region40: #{inception_forward.1} parent=11 // pred_fallthru
        _
      // Predicated region
      $region41: #{inception_forward.1} parent=11 // pred_check
        %p293 = pneg %p210
      $region42: #{inception_forward.1} parent=11 // pred_check_branch
        %295 = sbr.rel (%p293) target = $region44
      $region43: #{inception_forward.1} parent=11 // pred_region
        _
      $region44: #{inception_forward.1} parent=11 // pred_fallthru
        _
      // Predicated region
      $region45: #{inception_forward.1} parent=11 // pred_check
        %p296 = pneg %p231
      $region46: #{inception_forward.1} parent=11 // pred_check_branch
        %298 = sbr.rel (%p296) target = $region48
      $region47: #{inception_forward.1} parent=11 // pred_region
        _
      $region48: #{inception_forward.1} parent=11 // pred_fallthru
        _
    $region12: #{inception_forward.1} parent=5 // pred_fallthru
      _
    %p299 = scmp.lt.s32.totalorder %s16, 2
    // Predicated region
    $region49: #{inception_forward.1} parent=5 // pred_check
      %p300 = pneg %p299
    $region50: #{inception_forward.1} parent=5 // pred_check_branch
      %302 = sbr.rel (%p300) target = $region52
    $region51: #{inception_forward.1} parent=5 // pred_region
      // Predicated region
      $region53: #{inception_forward.1} parent=51 // pred_check
        %p303 = pneg %p57
      $region54: #{inception_forward.1} parent=51 // pred_check_branch
        %305 = sbr.rel (%p303) target = $region56
      $region55: #{inception_forward.1} parent=51 // pred_region
        %p306 = scmp.lt.s32.totalorder %s16, 1
        %s307 = scalar_select %p306, %s16, 1
        %s308 = smul.addr %s307, 2
        %s309 = smul.addr %s308, 4
        %s310 = scalar_lea.vmem %s1, %s309
      $region56: #{inception_forward.1} parent=51 // pred_fallthru
        _
    $region52: #{inception_forward.1} parent=5 // pred_fallthru
      _
    %p311 = scmp.le.s32.totalorder 1, %s16
    %p312 = scmp.lt.s32.totalorder %s16, 3
    %p313 = pnand %p311, %p312
    %p314 = pneg %p313
    // Predicated region
    $region57: #{inception_forward.1} parent=5 // pred_check
      _
    $region58: #{inception_forward.1} parent=5 // pred_check_branch
      %316 = sbr.rel (%p313) target = $region60
    $region59: #{inception_forward.1} parent=5 // pred_region
      %s317 = ssub.s32 %s16, 1
      %p318 = pneg %p37
      %p319 = pneg %p34
      %p320 = scmp.lt.s32.totalorder %s21, 1
      %s321 = scalar_select %p320, %s21, 1
      %s322 = smul.addr %s321, 2
      %s323 = smul.addr %s322, 4
      %s324 = scalar_lea.vmem %s1, %s323
      %p325 = pneg %p63
      %p326 = pneg %p60
      %p327 = pneg %p84
      %p328 = pneg %p81
      %p329 = pneg %p105
      %p330 = pneg %p102
      %p331 = pneg %p126
      %p332 = pneg %p123
      %p333 = pneg %p147
      %p334 = pneg %p144
      %p335 = pneg %p168
      %p336 = pneg %p165
      %p337 = pneg %p189
      %p338 = pneg %p186
      %p339 = pneg %p210
      %p340 = pneg %p207
      %p341 = pneg %p231
      %p342 = pneg %p228
      %p343 = pneg %p257
      %p344 = pneg %p254
      %p345 = scmp.lt.s32.totalorder %s21, 1
      %s346 = scalar_select %p345, %s21, 1
      %s347 = smul.addr %s346, 8
      %s348 = smul.addr %s347, 8
      %s349 = scalar_lea.vmem %s10, %s348
      %p350 = scmp.lt.s32.totalorder %s21, 1
      %s351 = scalar_select %p350, %s21, 1
      %s352 = smul.addr %s351, 2
      %s353 = smul.addr %s352, 4
      %s354 = scalar_lea.vmem %s1, %s353
      %p355 = scmp.lt.s32.totalorder %s21, 1
      %s356 = scalar_select %p355, %s21, 1
      %s357 = smul.addr %s356, 8
      %s358 = smul.addr %s357, 8
      %s359 = scalar_lea.vmem %s10, %s358
      %v360 = vld [vmem:[%s0] ss:$2 sm:$0x3]
      %s361 = scalar_lea.vmem %s0, 1
      %v362 = vld [vmem:[%s361] ss:$2 sm:$0x3]
      %v363 = vld [vmem:[%s354] sm:$0xff]
      %v364 = vld [vmem:[%s2] sm:$0xff]
      %v365 = vld [vmem:[%s2 + $0x8] sm:$0xff]
      %v366 = vld [vmem:[%s3] sm:$0xff]
      %v367 = vld [vmem:[%s3 + $0x8] sm:$0xff]
      %369 = vset.pattern.permute.xlu0 0
      %370 = vperm.xlu0 %369, %v366
      %v371 = vpop.permute.xlu0 %370
      %374 = vset.pattern.permute.xlu0 0
      %375 = vperm.xlu0 %374, %v367
      %v376 = vpop.permute.xlu0 %375
      %v379 = vcombine.high %v363, %v363
      %vm380 = vcmask 31744
      %v382 = vsel %vm380, %v364, 0
      %v385 = vsel %vm380, %v365, 0
      %vm387 = vcmask 1043456
      %v388 = vsel %vm387, %v363, 0
      %v390 = vsel %vm387, %v379, 0
      %392 = vmatprep.subr.mxu0 %v390
      %393 = vmatpush1.msra.mxu0 %v388
      %394 = vmatprep.subr.mxu0 0.0
      %395 = vmatpush1.msra.mxu0 0.0
      %396 = vmatprep.subr.mxu0 0.0
      %397 = vmatpush1.msra.mxu0 0.0
      %398 = vmatprep.subr.mxu0 0.0
      %399 = vmatpush1.msra.mxu0 0.0
      %400 = vmatprep.subr.mxu0 0.0
      %401 = vmatpush1.msra.mxu0 0.0
      %402 = vmatprep.subr.mxu0 0.0
      %403 = vmatpush1.msra.mxu0 0.0
      %404 = vmatprep.subr.mxu0 0.0
      %405 = vmatpush1.msra.mxu0 0.0
      %406 = vmatprep.subr.mxu0 0.0
      %407 = vmatpush1.msra.mxu0 0.0
      %408 = vmatprep.subr.mxu0 0.0
      %409 = vmatpush1.msra.mxu0 0.0
      %410 = vmatprep.subr.mxu0 0.0
      %411 = vmatpush1.msra.mxu0 0.0
      %412 = vmatprep.subr.mxu0 0.0
      %413 = vmatpush1.msra.mxu0 0.0
      %414 = vmatprep.subr.mxu0 0.0
      %415 = vmatpush1.msra.mxu0 0.0
      %416 = vmatprep.subr.mxu0 0.0
      %417 = vmatpush1.msra.mxu0 0.0
      %418 = vmatprep.subr.mxu0 0.0
      %419 = vmatpush1.msra.mxu0 0.0
      %420 = vmatprep.subr.mxu0 0.0
      %421 = vmatpush1.msra.mxu0 0.0
      %422 = vmatprep.subr.mxu0 0.0
      %423 = vmatpush1.msra.mxu0 0.0
      %424 = vmatprep.subr.mxu0 0.0
      %425 = vmatpush1.msra.mxu0 0.0
      %426 = vmatprep.subr.mxu0 0.0
      %427 = vmatpush1.msra.mxu0 0.0
      %428 = vmatprep.subr.mxu0 0.0
      %429 = vmatpush1.msra.mxu0 0.0
      %430 = vmatprep.subr.mxu0 0.0
      %431 = vmatpush1.msra.mxu0 0.0
      %432 = vmatprep.subr.mxu0 0.0
      %433 = vmatpush1.msra.mxu0 0.0
      %434 = vmatprep.subr.mxu0 0.0
      %435 = vmatpush1.msra.mxu0 0.0
      %436 = vmatprep.subr.mxu0 0.0
      %437 = vmatpush1.msra.mxu0 0.0
      %438 = vmatprep.subr.mxu0 0.0
      %439 = vmatpush1.msra.mxu0 0.0
      %440 = vmatprep.subr.mxu0 0.0
      %441 = vmatpush1.msra.mxu0 0.0
      %442 = vmatprep.subr.mxu0 0.0
      %443 = vmatpush1.msra.mxu0 0.0
      %444 = vmatprep.subr.mxu0 0.0
      %445 = vmatpush1.msra.mxu0 0.0
      %446 = vmatprep.subr.mxu0 0.0
      %447 = vmatpush1.msra.mxu0 0.0
      %448 = vmatprep.subr.mxu0 0.0
      %449 = vmatpush1.msra.mxu0 0.0
      %450 = vmatprep.subr.mxu0 0.0
      %451 = vmatpush1.msra.mxu0 0.0
      %452 = vmatprep.subr.mxu0 0.0
      %453 = vmatpush1.msra.mxu0 0.0
      %454 = vmatprep.subr.mxu0 0.0
      %455 = vmatpush1.msra.mxu0 0.0
      %456 = vmatprep.mubr.f32.mxu0 0.0
      %457 = vmatmul.mubr.f32.gmra.mrb[0].mxu0 %v382
      %v458 = vpop.f32.mrb[0].mxu0
      %v459 = vadd.f32 %v371, %v458
      %v460 = vpop.f32.mrb[0].mxu0
      %v461 = vadd.f32 %v371, %v460
      %462 = vmatprep.mubr.f32.mxu0 0.0
      %463 = vmatmul.mubr.f32.gmra.mrb[0].mxu0 %v385
      %v464 = vpop.f32.mrb[0].mxu0
      %v465 = vadd.f32 %v376, %v464
      %v466 = vpop.f32.mrb[0].mxu0
      %v467 = vadd.f32 %v376, %v466
      %468 = vdwg.mxu0
      %v469 = vmax.f32 %v459, 0.0
      %v470 = vmax.f32 %v461, 0.0
      %v471 = vmax.f32 %v465, 0.0
      %v472 = vmax.f32 %v467, 0.0
      %473 = vrot.lane.b32.xlu0 %v471, 17
      %v474 = vpop.permute.xlu0 %473
      %475 = vrot.lane.b32.xlu0 %v472, 17
      %v476 = vpop.permute.xlu0 %475
      %v477 = vlaneseq
      %v478 = vand.u32 %v477, 127
      %vm479 = vcmp.lt.s32.totalorder %v478, 17
      %v480 = vsel %vm479, %v474, %v476
      %v481 = vsel %vm479, %v476, %v474
      %vm482 = vcmp.ge.s32.totalorder %v360, 1
      %vm483 = vcmp.lt.s32.totalorder %v360, 17
      %vm484 = vmand %vm482, %vm483
      %vm485 = vcmp.ge.s32.totalorder %v362, 1
      %vm486 = vmand %vm484, %vm485
      %vm487 = vcmp.lt.s32.totalorder %v362, 17
      %vm488 = vmand %vm486, %vm487
      %v489 = vsel %vm488, 1, 0
      %v490 = vlaneseq
      %v491 = vshrl.u32 %v490, 7
      %v492 = vsub.s32 0, %v491
      %v493 = vrot.slane %v489, %v492
      %v494 = vlaneseq
      %v495 = vshrl.u32 %v494, 7
      %v496 = vsub.s32 1, %v495
      %v497 = vrot.slane %v489, %v496
      %vm498 = vcmp.eq.s32.totalorder %v493, 1
      %vm499 = vcmp.eq.s32.totalorder %v497, 1
      %v500 = vsel %vm498, %v481, 0.0
      %v501 = vsel %vm499, %v480, 0.0
      %502 = vrot.lane.b32.xlu0 %v471, 16
      %v503 = vpop.permute.xlu0 %502
      %504 = vrot.lane.b32.xlu0 %v472, 16
      %v505 = vpop.permute.xlu0 %504
      %vm506 = vcmp.lt.s32.totalorder %v478, 16
      %v507 = vsel %vm506, %v503, %v505
      %v508 = vsel %vm506, %v505, %v503
      %vm509 = vcmp.ge.s32.totalorder %v362, 0
      %vm510 = vmand %vm484, %vm509
      %vm511 = vcmp.lt.s32.totalorder %v362, 16
      %vm512 = vmand %vm510, %vm511
      %v513 = vsel %vm512, 1, 0
      %v514 = vlaneseq
      %v515 = vshrl.u32 %v514, 7
      %v516 = vsub.s32 0, %v515
      %v517 = vrot.slane %v513, %v516
      %v518 = vlaneseq
      %v519 = vshrl.u32 %v518, 7
      %v520 = vsub.s32 1, %v519
      %v521 = vrot.slane %v513, %v520
      %vm522 = vcmp.eq.s32.totalorder %v517, 1
      %vm523 = vcmp.eq.s32.totalorder %v521, 1
      %v524 = vsel %vm522, %v508, 0.0
      %v525 = vsel %vm523, %v507, 0.0
      %526 = vrot.lane.b32.xlu0 %v471, 15
      %v527 = vpop.permute.xlu0 %526
      %528 = vrot.lane.b32.xlu0 %v472, 15
      %v529 = vpop.permute.xlu0 %528
      %vm530 = vcmp.lt.s32.totalorder %v478, 15
      %v531 = vsel %vm530, %v527, %v529
      %v532 = vsel %vm530, %v529, %v527
      %vm533 = vcmp.ge.s32.totalorder %v362, 4294967295
      %vm534 = vmand %vm484, %vm533
      %vm535 = vcmp.lt.s32.totalorder %v362, 15
      %vm536 = vmand %vm534, %vm535
      %v537 = vsel %vm536, 1, 0
      %v538 = vlaneseq
      %v539 = vshrl.u32 %v538, 7
      %v540 = vsub.s32 0, %v539
      %v541 = vrot.slane %v537, %v540
      %v542 = vlaneseq
      %v543 = vshrl.u32 %v542, 7
      %v544 = vsub.s32 1, %v543
      %v545 = vrot.slane %v537, %v544
      %vm546 = vcmp.eq.s32.totalorder %v541, 1
      %vm547 = vcmp.eq.s32.totalorder %v545, 1
      %v548 = vsel %vm546, %v532, 0.0
      %v549 = vsel %vm547, %v531, 0.0
      %550 = vrot.lane.b32.xlu0 %v471, 1
      %v551 = vpop.permute.xlu0 %550
      %552 = vrot.lane.b32.xlu0 %v472, 1
      %v553 = vpop.permute.xlu0 %552
      %vm554 = vcmp.lt.s32.totalorder %v478, 1
      %v555 = vsel %vm554, %v551, %v553
      %v556 = vsel %vm554, %v553, %v551
      %vm557 = vcmp.ge.s32.totalorder %v360, 0
      %vm558 = vcmp.lt.s32.totalorder %v360, 16
      %vm559 = vmand %vm557, %vm558
      %vm560 = vmand %vm559, %vm485
      %vm561 = vmand %vm560, %vm487
      %v562 = vsel %vm561, 1, 0
      %v563 = vlaneseq
      %v564 = vshrl.u32 %v563, 7
      %v565 = vsub.s32 0, %v564
      %v566 = vrot.slane %v562, %v565
      %v567 = vlaneseq
      %v568 = vshrl.u32 %v567, 7
      %v569 = vsub.s32 1, %v568
      %v570 = vrot.slane %v562, %v569
      %vm571 = vcmp.eq.s32.totalorder %v566, 1
      %vm572 = vcmp.eq.s32.totalorder %v570, 1
      %v573 = vsel %vm571, %v556, 0.0
      %v574 = vsel %vm572, %v555, 0.0
      %575 = vrot.lane.b32.xlu0 %v471, 127
      %v576 = vpop.permute.xlu0 %575
      %577 = vrot.lane.b32.xlu0 %v472, 127
      %v578 = vpop.permute.xlu0 %577
      %vm579 = vcmp.lt.s32.totalorder %v478, 127
      %v580 = vsel %vm579, %v576, %v578
      %v581 = vsel %vm579, %v578, %v576
      %vm582 = vmand %vm559, %vm533
      %vm583 = vmand %vm582, %vm535
      %v584 = vsel %vm583, 1, 0
      %v585 = vlaneseq
      %v586 = vshrl.u32 %v585, 7
      %v587 = vsub.s32 0, %v586
      %v588 = vrot.slane %v584, %v587
      %v589 = vlaneseq
      %v590 = vshrl.u32 %v589, 7
      %v591 = vsub.s32 1, %v590
      %v592 = vrot.slane %v584, %v591
      %vm593 = vcmp.eq.s32.totalorder %v588, 1
      %vm594 = vcmp.eq.s32.totalorder %v592, 1
      %v595 = vsel %vm593, %v580, 0.0
      %v596 = vsel %vm594, %v581, 0.0
      %597 = vrot.lane.b32.xlu0 %v471, 113
      %v598 = vpop.permute.xlu0 %597
      %599 = vrot.lane.b32.xlu0 %v472, 113
      %v600 = vpop.permute.xlu0 %599
      %vm601 = vcmp.lt.s32.totalorder %v478, 113
      %v602 = vsel %vm601, %v598, %v600
      %v603 = vsel %vm601, %v600, %v598
      %vm604 = vcmp.ge.s32.totalorder %v360, 4294967295
      %vm605 = vcmp.lt.s32.totalorder %v360, 15
      %vm606 = vmand %vm604, %vm605
      %vm607 = vmand %vm606, %vm485
      %vm608 = vmand %vm607, %vm487
      %v609 = vsel %vm608, 1, 0
      %v610 = vlaneseq
      %v611 = vshrl.u32 %v610, 7
      %v612 = vsub.s32 0, %v611
      %v613 = vrot.slane %v609, %v612
      %v614 = vlaneseq
      %v615 = vshrl.u32 %v614, 7
      %v616 = vsub.s32 1, %v615
      %v617 = vrot.slane %v609, %v616
      %vm618 = vcmp.eq.s32.totalorder %v613, 1
      %vm619 = vcmp.eq.s32.totalorder %v617, 1
      %v620 = vsel %vm618, %v602, 0.0
      %v621 = vsel %vm619, %v603, 0.0
      %622 = vrot.lane.b32.xlu0 %v471, 112
      %v623 = vpop.permute.xlu0 %622
      %624 = vrot.lane.b32.xlu0 %v472, 112
      %v625 = vpop.permute.xlu0 %624
      %vm626 = vcmp.lt.s32.totalorder %v478, 112
      %v627 = vsel %vm626, %v623, %v625
      %v628 = vsel %vm626, %v625, %v623
      %vm629 = vmand %vm606, %vm509
      %vm630 = vmand %vm629, %vm511
      %v631 = vsel %vm630, 1, 0
      %v632 = vlaneseq
      %v633 = vshrl.u32 %v632, 7
      %v634 = vsub.s32 0, %v633
      %v635 = vrot.slane %v631, %v634
      %v636 = vlaneseq
      %v637 = vshrl.u32 %v636, 7
      %v638 = vsub.s32 1, %v637
      %v639 = vrot.slane %v631, %v638
      %vm640 = vcmp.eq.s32.totalorder %v635, 1
      %vm641 = vcmp.eq.s32.totalorder %v639, 1
      %v642 = vsel %vm640, %v627, 0.0
      %v643 = vsel %vm641, %v628, 0.0
      %644 = vrot.lane.b32.xlu0 %v471, 111
      %v645 = vpop.permute.xlu0 %644
      %646 = vrot.lane.b32.xlu0 %v472, 111
      %v647 = vpop.permute.xlu0 %646
      %vm648 = vcmp.lt.s32.totalorder %v478, 111
      %v649 = vsel %vm648, %v645, %v647
      %v650 = vsel %vm648, %v647, %v645
      %vm651 = vmand %vm606, %vm533
      %vm652 = vmand %vm651, %vm535
      %v653 = vsel %vm652, 1, 0
      %v654 = vlaneseq
      %v655 = vshrl.u32 %v654, 7
      %v656 = vsub.s32 0, %v655
      %v657 = vrot.slane %v653, %v656
      %v658 = vlaneseq
      %v659 = vshrl.u32 %v658, 7
      %v660 = vsub.s32 1, %v659
      %v661 = vrot.slane %v653, %v660
      %vm662 = vcmp.eq.s32.totalorder %v657, 1
      %vm663 = vcmp.eq.s32.totalorder %v661, 1
      %v664 = vsel %vm662, %v649, 0.0
      %v665 = vsel %vm663, %v650, 0.0
      %v668 = vrot.slane %v524, 4
      %v669 = vrot.slane %v525, 4
      %v674 = vrot.slane %v573, 4
      %v675 = vrot.slane %v574, 4
      %v680 = vrot.slane %v595, 4
      %v681 = vrot.slane %v596, 4
      %v686 = vrot.slane %v642, 4
      %v687 = vrot.slane %v643, 4
      %v690 = vsel %vm387, %v500, %v668
      %v691 = vsel %vm387, %v501, %v669
      %v692 = vsel %vm387, %v548, %v674
      %v693 = vsel %vm387, %v549, %v675
      %v694 = vsel %vm387, %v471, %v680
      %v695 = vsel %vm387, %v472, %v681
      %v696 = vsel %vm387, %v620, %v686
      %v697 = vsel %vm387, %v621, %v687
      %v698 = vld [vmem:[%s4] sm:$0xff]
      %v699 = vld [vmem:[%s5] sm:$0xff]
      %701 = vset.pattern.permute.xlu0 0
      %702 = vperm.xlu0 %701, %v699
      %v703 = vpop.permute.xlu0 %702
      %vm705 = vcmask 293888
      %v707 = vsel %vm705, %v698, 0
      %v710 = vsel %vm387, %v664, 0
      %v713 = vsel %vm387, %v665, 0
      %715 = vmatprep.subr.mxu0 %v691
      %716 = vmatpush1.msra.mxu0 %v690
      %717 = vmatprep.subr.mxu0 %v693
      %718 = vmatpush1.msra.mxu0 %v692
      %719 = vmatprep.subr.mxu0 %v695
      %720 = vmatpush1.msra.mxu0 %v694
      %721 = vmatprep.subr.mxu0 %v697
      %722 = vmatpush1.msra.mxu0 %v696
      %723 = vmatprep.subr.mxu0 %v713
      %724 = vmatpush1.msra.mxu0 %v710
      %725 = vmatprep.subr.mxu0 0.0
      %726 = vmatpush1.msra.mxu0 0.0
      %727 = vmatprep.subr.mxu0 0.0
      %728 = vmatpush1.msra.mxu0 0.0
      %729 = vmatprep.subr.mxu0 0.0
      %730 = vmatpush1.msra.mxu0 0.0
      %731 = vmatprep.subr.mxu0 0.0
      %732 = vmatpush1.msra.mxu0 0.0
      %733 = vmatprep.subr.mxu0 0.0
      %734 = vmatpush1.msra.mxu0 0.0
      %735 = vmatprep.subr.mxu0 0.0
      %736 = vmatpush1.msra.mxu0 0.0
      %737 = vmatprep.subr.mxu0 0.0
      %738 = vmatpush1.msra.mxu0 0.0
      %739 = vmatprep.subr.mxu0 0.0
      %740 = vmatpush1.msra.mxu0 0.0
      %741 = vmatprep.subr.mxu0 0.0
      %742 = vmatpush1.msra.mxu0 0.0
      %743 = vmatprep.subr.mxu0 0.0
      %744 = vmatpush1.msra.mxu0 0.0
      %745 = vmatprep.subr.mxu0 0.0
      %746 = vmatpush1.msra.mxu0 0.0
      %747 = vmatprep.subr.mxu0 0.0
      %748 = vmatpush1.msra.mxu0 0.0
      %749 = vmatprep.subr.mxu0 0.0
      %750 = vmatpush1.msra.mxu0 0.0
      %751 = vmatprep.subr.mxu0 0.0
      %752 = vmatpush1.msra.mxu0 0.0
      %753 = vmatprep.subr.mxu0 0.0
      %754 = vmatpush1.msra.mxu0 0.0
      %755 = vmatprep.subr.mxu0 0.0
      %756 = vmatpush1.msra.mxu0 0.0
      %757 = vmatprep.subr.mxu0 0.0
      %758 = vmatpush1.msra.mxu0 0.0
      %759 = vmatprep.subr.mxu0 0.0
      %760 = vmatpush1.msra.mxu0 0.0
      %761 = vmatprep.subr.mxu0 0.0
      %762 = vmatpush1.msra.mxu0 0.0
      %763 = vmatprep.subr.mxu0 0.0
      %764 = vmatpush1.msra.mxu0 0.0
      %765 = vmatprep.subr.mxu0 0.0
      %766 = vmatpush1.msra.mxu0 0.0
      %767 = vmatprep.subr.mxu0 0.0
      %768 = vmatpush1.msra.mxu0 0.0
      %769 = vmatprep.subr.mxu0 0.0
      %770 = vmatpush1.msra.mxu0 0.0
      %771 = vmatprep.subr.mxu0 0.0
      %772 = vmatpush1.msra.mxu0 0.0
      %773 = vmatprep.subr.mxu0 0.0
      %774 = vmatpush1.msra.mxu0 0.0
      %775 = vmatprep.subr.mxu0 0.0
      %776 = vmatpush1.msra.mxu0 0.0
      %777 = vmatprep.subr.mxu0 0.0
      %778 = vmatpush1.msra.mxu0 0.0
      %779 = vmatprep.mubr.f32.mxu0 0.0
      %780 = vmatmul.mubr.f32.gmra.mrb[0].mxu0 %v707
      %v781 = vpop.f32.mrb[0].mxu0
      %v782 = vadd.f32 %v703, %v781
      %v783 = vpop.f32.mrb[0].mxu0
      %v784 = vadd.f32 %v703, %v783
      %785 = vdwg.mxu0
      %v786 = vmax.f32 %v782, 0.0
      %v787 = vmax.f32 %v784, 0.0
      %v790 = vrot.slane %v471, 4
      %v791 = vrot.slane %v472, 4
      %794 = vrot.lane.b32.xlu0 %v790, 34
      %v795 = vpop.permute.xlu0 %794
      %796 = vrot.lane.b32.xlu0 %v791, 34
      %v797 = vpop.permute.xlu0 %796
      %vm798 = vcmp.lt.s32.totalorder %v478, 34
      %v799 = vsel %vm798, %v795, %v797
      %v800 = vsel %vm798, %v797, %v795
      %vm801 = vcmp.ge.s32.totalorder %v360, 2
      %vm802 = vcmp.lt.s32.totalorder %v360, 18
      %vm803 = vmand %vm801, %vm802
      %vm804 = vcmp.ge.s32.totalorder %v362, 2
      %vm805 = vmand %vm803, %vm804
      %vm806 = vcmp.lt.s32.totalorder %v362, 18
      %vm807 = vmand %vm805, %vm806
      %v808 = vsel %vm807, 1, 0
      %v809 = vlaneseq
      %v810 = vshrl.u32 %v809, 7
      %v811 = vsub.s32 0, %v810
      %v812 = vrot.slane %v808, %v811
      %v813 = vlaneseq
      %v814 = vshrl.u32 %v813, 7
      %v815 = vsub.s32 1, %v814
      %v816 = vrot.slane %v808, %v815
      %vm817 = vcmp.eq.s32.totalorder %v812, 1
      %vm818 = vcmp.eq.s32.totalorder %v816, 1
      %v819 = vsel %vm817, %v800, 0.0
      %v820 = vsel %vm818, %v799, 0.0
      %821 = vrot.lane.b32.xlu0 %v790, 33
      %v822 = vpop.permute.xlu0 %821
      %823 = vrot.lane.b32.xlu0 %v791, 33
      %v824 = vpop.permute.xlu0 %823
      %vm825 = vcmp.lt.s32.totalorder %v478, 33
      %v826 = vsel %vm825, %v822, %v824
      %v827 = vsel %vm825, %v824, %v822
      %vm828 = vmand %vm803, %vm485
      %vm829 = vmand %vm828, %vm487
      %v830 = vsel %vm829, 1, 0
      %v831 = vlaneseq
      %v832 = vshrl.u32 %v831, 7
      %v833 = vsub.s32 0, %v832
      %v834 = vrot.slane %v830, %v833
      %v835 = vlaneseq
      %v836 = vshrl.u32 %v835, 7
      %v837 = vsub.s32 1, %v836
      %v838 = vrot.slane %v830, %v837
      %vm839 = vcmp.eq.s32.totalorder %v834, 1
      %vm840 = vcmp.eq.s32.totalorder %v838, 1
      %v841 = vsel %vm839, %v827, 0.0
      %v842 = vsel %vm840, %v826, 0.0
      %843 = vrot.lane.b32.xlu0 %v790, 32
      %v844 = vpop.permute.xlu0 %843
      %845 = vrot.lane.b32.xlu0 %v791, 32
      %v846 = vpop.permute.xlu0 %845
      %vm847 = vcmp.lt.s32.totalorder %v478, 32
      %v848 = vsel %vm847, %v844, %v846
      %v849 = vsel %vm847, %v846, %v844
      %vm850 = vmand %vm803, %vm509
      %vm851 = vmand %vm850, %vm511
      %v852 = vsel %vm851, 1, 0
      %v853 = vlaneseq
      %v854 = vshrl.u32 %v853, 7
      %v855 = vsub.s32 0, %v854
      %v856 = vrot.slane %v852, %v855
      %v857 = vlaneseq
      %v858 = vshrl.u32 %v857, 7
      %v859 = vsub.s32 1, %v858
      %v860 = vrot.slane %v852, %v859
      %vm861 = vcmp.eq.s32.totalorder %v856, 1
      %vm862 = vcmp.eq.s32.totalorder %v860, 1
      %v863 = vsel %vm861, %v849, 0.0
      %v864 = vsel %vm862, %v848, 0.0
      %865 = vrot.lane.b32.xlu0 %v790, 31
      %v866 = vpop.permute.xlu0 %865
      %867 = vrot.lane.b32.xlu0 %v791, 31
      %v868 = vpop.permute.xlu0 %867
      %vm869 = vcmp.lt.s32.totalorder %v478, 31
      %v870 = vsel %vm869, %v866, %v868
      %v871 = vsel %vm869, %v868, %v866
      %vm872 = vmand %vm803, %vm533
      %vm873 = vmand %vm872, %vm535
      %v874 = vsel %vm873, 1, 0
      %v875 = vlaneseq
      %v876 = vshrl.u32 %v875, 7
      %v877 = vsub.s32 0, %v876
      %v878 = vrot.slane %v874, %v877
      %v879 = vlaneseq
      %v880 = vshrl.u32 %v879, 7
      %v881 = vsub.s32 1, %v880
      %v882 = vrot.slane %v874, %v881
      %vm883 = vcmp.eq.s32.totalorder %v878, 1
      %vm884 = vcmp.eq.s32.totalorder %v882, 1
      %v885 = vsel %vm883, %v871, 0.0
      %v886 = vsel %vm884, %v870, 0.0
      %887 = vrot.lane.b32.xlu0 %v790, 30
      %v888 = vpop.permute.xlu0 %887
      %889 = vrot.lane.b32.xlu0 %v791, 30
      %v890 = vpop.permute.xlu0 %889
      %vm891 = vcmp.lt.s32.totalorder %v478, 30
      %v892 = vsel %vm891, %v888, %v890
      %v893 = vsel %vm891, %v890, %v888
      %vm894 = vcmp.ge.s32.totalorder %v362, 4294967294
      %vm895 = vmand %vm803, %vm894
      %vm896 = vcmp.lt.s32.totalorder %v362, 14
      %vm897 = vmand %vm895, %vm896
      %v898 = vsel %vm897, 1, 0
      %v899 = vlaneseq
      %v900 = vshrl.u32 %v899, 7
      %v901 = vsub.s32 0, %v900
      %v902 = vrot.slane %v898, %v901
      %v903 = vlaneseq
      %v904 = vshrl.u32 %v903, 7
      %v905 = vsub.s32 1, %v904
      %v906 = vrot.slane %v898, %v905
      %vm907 = vcmp.eq.s32.totalorder %v902, 1
      %vm908 = vcmp.eq.s32.totalorder %v906, 1
      %v909 = vsel %vm907, %v893, 0.0
      %v910 = vsel %vm908, %v892, 0.0
      %911 = vrot.lane.b32.xlu0 %v790, 18
      %v912 = vpop.permute.xlu0 %911
      %913 = vrot.lane.b32.xlu0 %v791, 18
      %v914 = vpop.permute.xlu0 %913
      %vm915 = vcmp.lt.s32.totalorder %v478, 18
      %v916 = vsel %vm915, %v912, %v914
      %v917 = vsel %vm915, %v914, %v912
      %vm918 = vmand %vm484, %vm804
      %vm919 = vmand %vm918, %vm806
      %v920 = vsel %vm919, 1, 0
      %v921 = vlaneseq
      %v922 = vshrl.u32 %v921, 7
      %v923 = vsub.s32 0, %v922
      %v924 = vrot.slane %v920, %v923
      %v925 = vlaneseq
      %v926 = vshrl.u32 %v925, 7
      %v927 = vsub.s32 1, %v926
      %v928 = vrot.slane %v920, %v927
      %vm929 = vcmp.eq.s32.totalorder %v924, 1
      %vm930 = vcmp.eq.s32.totalorder %v928, 1
      %v931 = vsel %vm929, %v917, 0.0
      %v932 = vsel %vm930, %v916, 0.0
      %933 = vrot.lane.b32.xlu0 %v790, 17
      %v934 = vpop.permute.xlu0 %933
      %935 = vrot.lane.b32.xlu0 %v791, 17
      %v936 = vpop.permute.xlu0 %935
      %v937 = vsel %vm479, %v934, %v936
      %v938 = vsel %vm479, %v936, %v934
      %v939 = vsel %vm498, %v938, 0.0
      %v940 = vsel %vm499, %v937, 0.0
      %941 = vrot.lane.b32.xlu0 %v790, 16
      %v942 = vpop.permute.xlu0 %941
      %943 = vrot.lane.b32.xlu0 %v791, 16
      %v944 = vpop.permute.xlu0 %943
      %v945 = vsel %vm506, %v942, %v944
      %v946 = vsel %vm506, %v944, %v942
      %v947 = vsel %vm522, %v946, 0.0
      %v948 = vsel %vm523, %v945, 0.0
      %949 = vrot.lane.b32.xlu0 %v790, 15
      %v950 = vpop.permute.xlu0 %949
      %951 = vrot.lane.b32.xlu0 %v791, 15
      %v952 = vpop.permute.xlu0 %951
      %v953 = vsel %vm530, %v950, %v952
      %v954 = vsel %vm530, %v952, %v950
      %v955 = vsel %vm546, %v954, 0.0
      %v956 = vsel %vm547, %v953, 0.0
      %957 = vrot.lane.b32.xlu0 %v790, 14
      %v958 = vpop.permute.xlu0 %957
      %959 = vrot.lane.b32.xlu0 %v791, 14
      %v960 = vpop.permute.xlu0 %959
      %vm961 = vcmp.lt.s32.totalorder %v478, 14
      %v962 = vsel %vm961, %v958, %v960
      %v963 = vsel %vm961, %v960, %v958
      %vm964 = vmand %vm484, %vm894
      %vm965 = vmand %vm964, %vm896
      %v966 = vsel %vm965, 1, 0
      %v967 = vlaneseq
      %v968 = vshrl.u32 %v967, 7
      %v969 = vsub.s32 0, %v968
      %v970 = vrot.slane %v966, %v969
      %v971 = vlaneseq
      %v972 = vshrl.u32 %v971, 7
      %v973 = vsub.s32 1, %v972
      %v974 = vrot.slane %v966, %v973
      %vm975 = vcmp.eq.s32.totalorder %v970, 1
      %vm976 = vcmp.eq.s32.totalorder %v974, 1
      %v977 = vsel %vm975, %v963, 0.0
      %v978 = vsel %vm976, %v962, 0.0
      %979 = vrot.lane.b32.xlu0 %v790, 2
      %v980 = vpop.permute.xlu0 %979
      %981 = vrot.lane.b32.xlu0 %v791, 2
      %v982 = vpop.permute.xlu0 %981
      %vm983 = vcmp.lt.s32.totalorder %v478, 2
      %v984 = vsel %vm983, %v980, %v982
      %v985 = vsel %vm983, %v982, %v980
      %vm986 = vmand %vm559, %vm804
      %vm987 = vmand %vm986, %vm806
      %v988 = vsel %vm987, 1, 0
      %v989 = vlaneseq
      %v990 = vshrl.u32 %v989, 7
      %v991 = vsub.s32 0, %v990
      %v992 = vrot.slane %v988, %v991
      %v993 = vlaneseq
      %v994 = vshrl.u32 %v993, 7
      %v995 = vsub.s32 1, %v994
      %v996 = vrot.slane %v988, %v995
      %vm997 = vcmp.eq.s32.totalorder %v992, 1
      %vm998 = vcmp.eq.s32.totalorder %v996, 1
      %v999 = vsel %vm997, %v985, 0.0
      %v1000 = vsel %vm998, %v984, 0.0
      %1001 = vrot.lane.b32.xlu0 %v790, 1
      %v1002 = vpop.permute.xlu0 %1001
      %1003 = vrot.lane.b32.xlu0 %v791, 1
      %v1004 = vpop.permute.xlu0 %1003
      %v1005 = vsel %vm554, %v1002, %v1004
      %v1006 = vsel %vm554, %v1004, %v1002
      %v1007 = vsel %vm571, %v1006, 0.0
      %v1008 = vsel %vm572, %v1005, 0.0
      %1009 = vrot.lane.b32.xlu0 %v790, 127
      %v1010 = vpop.permute.xlu0 %1009
      %1011 = vrot.lane.b32.xlu0 %v791, 127
      %v1012 = vpop.permute.xlu0 %1011
      %v1013 = vsel %vm579, %v1010, %v1012
      %v1014 = vsel %vm579, %v1012, %v1010
      %v1015 = vsel %vm593, %v1013, 0.0
      %v1016 = vsel %vm594, %v1014, 0.0
      %1017 = vrot.lane.b32.xlu0 %v790, 126
      %v1018 = vpop.permute.xlu0 %1017
      %1019 = vrot.lane.b32.xlu0 %v791, 126
      %v1020 = vpop.permute.xlu0 %1019
      %vm1021 = vcmp.lt.s32.totalorder %v478, 126
      %v1022 = vsel %vm1021, %v1018, %v1020
      %v1023 = vsel %vm1021, %v1020, %v1018
      %vm1024 = vmand %vm559, %vm894
      %vm1025 = vmand %vm1024, %vm896
      %v1026 = vsel %vm1025, 1, 0
      %v1027 = vlaneseq
      %v1028 = vshrl.u32 %v1027, 7
      %v1029 = vsub.s32 0, %v1028
      %v1030 = vrot.slane %v1026, %v1029
      %v1031 = vlaneseq
      %v1032 = vshrl.u32 %v1031, 7
      %v1033 = vsub.s32 1, %v1032
      %v1034 = vrot.slane %v1026, %v1033
      %vm1035 = vcmp.eq.s32.totalorder %v1030, 1
      %vm1036 = vcmp.eq.s32.totalorder %v1034, 1
      %v1037 = vsel %vm1035, %v1022, 0.0
      %v1038 = vsel %vm1036, %v1023, 0.0
      %1039 = vrot.lane.b32.xlu0 %v790, 114
      %v1040 = vpop.permute.xlu0 %1039
      %1041 = vrot.lane.b32.xlu0 %v791, 114
      %v1042 = vpop.permute.xlu0 %1041
      %vm1043 = vcmp.lt.s32.totalorder %v478, 114
      %v1044 = vsel %vm1043, %v1040, %v1042
      %v1045 = vsel %vm1043, %v1042, %v1040
      %vm1046 = vmand %vm606, %vm804
      %vm1047 = vmand %vm1046, %vm806
      %v1048 = vsel %vm1047, 1, 0
      %v1049 = vlaneseq
      %v1050 = vshrl.u32 %v1049, 7
      %v1051 = vsub.s32 0, %v1050
      %v1052 = vrot.slane %v1048, %v1051
      %v1053 = vlaneseq
      %v1054 = vshrl.u32 %v1053, 7
      %v1055 = vsub.s32 1, %v1054
      %v1056 = vrot.slane %v1048, %v1055
      %vm1057 = vcmp.eq.s32.totalorder %v1052, 1
      %vm1058 = vcmp.eq.s32.totalorder %v1056, 1
      %v1059 = vsel %vm1057, %v1044, 0.0
      %v1060 = vsel %vm1058, %v1045, 0.0
      %1061 = vrot.lane.b32.xlu0 %v790, 113
      %v1062 = vpop.permute.xlu0 %1061
      %1063 = vrot.lane.b32.xlu0 %v791, 113
      %v1064 = vpop.permute.xlu0 %1063
      %v1065 = vsel %vm601, %v1062, %v1064
      %v1066 = vsel %vm601, %v1064, %v1062
      %v1067 = vsel %vm618, %v1065, 0.0
      %v1068 = vsel %vm619, %v1066, 0.0
      %1069 = vrot.lane.b32.xlu0 %v790, 112
      %v1070 = vpop.permute.xlu0 %1069
      %1071 = vrot.lane.b32.xlu0 %v791, 112
      %v1072 = vpop.permute.xlu0 %1071
      %v1073 = vsel %vm626, %v1070, %v1072
      %v1074 = vsel %vm626, %v1072, %v1070
      %v1075 = vsel %vm640, %v1073, 0.0
      %v1076 = vsel %vm641, %v1074, 0.0
      %1077 = vrot.lane.b32.xlu0 %v790, 111
      %v1078 = vpop.permute.xlu0 %1077
      %1079 = vrot.lane.b32.xlu0 %v791, 111
      %v1080 = vpop.permute.xlu0 %1079
      %v1081 = vsel %vm648, %v1078, %v1080
      %v1082 = vsel %vm648, %v1080, %v1078
      %v1083 = vsel %vm662, %v1081, 0.0
      %v1084 = vsel %vm663, %v1082, 0.0
      %1085 = vrot.lane.b32.xlu0 %v790, 110
      %v1086 = vpop.permute.xlu0 %1085
      %1087 = vrot.lane.b32.xlu0 %v791, 110
      %v1088 = vpop.permute.xlu0 %1087
      %vm1089 = vcmp.lt.s32.totalorder %v478, 110
      %v1090 = vsel %vm1089, %v1086, %v1088
      %v1091 = vsel %vm1089, %v1088, %v1086
      %vm1092 = vmand %vm606, %vm894
      %vm1093 = vmand %vm1092, %vm896
      %v1094 = vsel %vm1093, 1, 0
      %v1095 = vlaneseq
      %v1096 = vshrl.u32 %v1095, 7
      %v1097 = vsub.s32 0, %v1096
      %v1098 = vrot.slane %v1094, %v1097
      %v1099 = vlaneseq
      %v1100 = vshrl.u32 %v1099, 7
      %v1101 = vsub.s32 1, %v1100
      %v1102 = vrot.slane %v1094, %v1101
      %vm1103 = vcmp.eq.s32.totalorder %v1098, 1
      %vm1104 = vcmp.eq.s32.totalorder %v1102, 1
      %v1105 = vsel %vm1103, %v1090, 0.0
      %v1106 = vsel %vm1104, %v1091, 0.0
      %1107 = vrot.lane.b32.xlu0 %v790, 98
      %v1108 = vpop.permute.xlu0 %1107
      %1109 = vrot.lane.b32.xlu0 %v791, 98
      %v1110 = vpop.permute.xlu0 %1109
      %vm1111 = vcmp.lt.s32.totalorder %v478, 98
      %v1112 = vsel %vm1111, %v1108, %v1110
      %v1113 = vsel %vm1111, %v1110, %v1108
      %vm1114 = vcmp.ge.s32.totalorder %v360, 4294967294
      %vm1115 = vcmp.lt.s32.totalorder %v360, 14
      %vm1116 = vmand %vm1114, %vm1115
      %vm1117 = vmand %vm1116, %vm804
      %vm1118 = vmand %vm1117, %vm806
      %v1119 = vsel %vm1118, 1, 0
      %v1120 = vlaneseq
      %v1121 = vshrl.u32 %v1120, 7
      %v1122 = vsub.s32 0, %v1121
      %v1123 = vrot.slane %v1119, %v1122
      %v1124 = vlaneseq
      %v1125 = vshrl.u32 %v1124, 7
      %v1126 = vsub.s32 1, %v1125
      %v1127 = vrot.slane %v1119, %v1126
      %vm1128 = vcmp.eq.s32.totalorder %v1123, 1
      %vm1129 = vcmp.eq.s32.totalorder %v1127, 1
      %v1130 = vsel %vm1128, %v1112, 0.0
      %v1131 = vsel %vm1129, %v1113, 0.0
      %1132 = vrot.lane.b32.xlu0 %v790, 97
      %v1133 = vpop.permute.xlu0 %1132
      %1134 = vrot.lane.b32.xlu0 %v791, 97
      %v1135 = vpop.permute.xlu0 %1134
      %vm1136 = vcmp.lt.s32.totalorder %v478, 97
      %v1137 = vsel %vm1136, %v1133, %v1135
      %v1138 = vsel %vm1136, %v1135, %v1133
      %vm1139 = vmand %vm1116, %vm485
      %vm1140 = vmand %vm1139, %vm487
      %v1141 = vsel %vm1140, 1, 0
      %v1142 = vlaneseq
      %v1143 = vshrl.u32 %v1142, 7
      %v1144 = vsub.s32 0, %v1143
      %v1145 = vrot.slane %v1141, %v1144
      %v1146 = vlaneseq
      %v1147 = vshrl.u32 %v1146, 7
      %v1148 = vsub.s32 1, %v1147
      %v1149 = vrot.slane %v1141, %v1148
      %vm1150 = vcmp.eq.s32.totalorder %v1145, 1
      %vm1151 = vcmp.eq.s32.totalorder %v1149, 1
      %v1152 = vsel %vm1150, %v1137, 0.0
      %v1153 = vsel %vm1151, %v1138, 0.0
      %1154 = vrot.lane.b32.xlu0 %v790, 96
      %v1155 = vpop.permute.xlu0 %1154
      %1156 = vrot.lane.b32.xlu0 %v791, 96
      %v1157 = vpop.permute.xlu0 %1156
      %vm1158 = vcmp.lt.s32.totalorder %v478, 96
      %v1159 = vsel %vm1158, %v1155, %v1157
      %v1160 = vsel %vm1158, %v1157, %v1155
      %vm1161 = vmand %vm1116, %vm509
      %vm1162 = vmand %vm1161, %vm511
      %v1163 = vsel %vm1162, 1, 0
      %v1164 = vlaneseq
      %v1165 = vshrl.u32 %v1164, 7
      %v1166 = vsub.s32 0, %v1165
      %v1167 = vrot.slane %v1163, %v1166
      %v1168 = vlaneseq
      %v1169 = vshrl.u32 %v1168, 7
      %v1170 = vsub.s32 1, %v1169
      %v1171 = vrot.slane %v1163, %v1170
      %vm1172 = vcmp.eq.s32.totalorder %v1167, 1
      %vm1173 = vcmp.eq.s32.totalorder %v1171, 1
      %v1174 = vsel %vm1172, %v1159, 0.0
      %v1175 = vsel %vm1173, %v1160, 0.0
      %1176 = vrot.lane.b32.xlu0 %v790, 95
      %v1177 = vpop.permute.xlu0 %1176
      %1178 = vrot.lane.b32.xlu0 %v791, 95
      %v1179 = vpop.permute.xlu0 %1178
      %vm1180 = vcmp.lt.s32.totalorder %v478, 95
      %v1181 = vsel %vm1180, %v1177, %v1179
      %v1182 = vsel %vm1180, %v1179, %v1177
      %vm1183 = vmand %vm1116, %vm533
      %vm1184 = vmand %vm1183, %vm535
      %v1185 = vsel %vm1184, 1, 0
      %v1186 = vlaneseq
      %v1187 = vshrl.u32 %v1186, 7
      %v1188 = vsub.s32 0, %v1187
      %v1189 = vrot.slane %v1185, %v1188
      %v1190 = vlaneseq
      %v1191 = vshrl.u32 %v1190, 7
      %v1192 = vsub.s32 1, %v1191
      %v1193 = vrot.slane %v1185, %v1192
      %vm1194 = vcmp.eq.s32.totalorder %v1189, 1
      %vm1195 = vcmp.eq.s32.totalorder %v1193, 1
      %v1196 = vsel %vm1194, %v1181, 0.0
      %v1197 = vsel %vm1195, %v1182, 0.0
      %1198 = vrot.lane.b32.xlu0 %v790, 94
      %v1199 = vpop.permute.xlu0 %1198
      %1200 = vrot.lane.b32.xlu0 %v791, 94
      %v1201 = vpop.permute.xlu0 %1200
      %vm1202 = vcmp.lt.s32.totalorder %v478, 94
      %v1203 = vsel %vm1202, %v1199, %v1201
      %v1204 = vsel %vm1202, %v1201, %v1199
      %vm1205 = vmand %vm1116, %vm894
      %vm1206 = vmand %vm1205, %vm896
      %v1207 = vsel %vm1206, 1, 0
      %v1208 = vlaneseq
      %v1209 = vshrl.u32 %v1208, 7
      %v1210 = vsub.s32 0, %v1209
      %v1211 = vrot.slane %v1207, %v1210
      %v1212 = vlaneseq
      %v1213 = vshrl.u32 %v1212, 7
      %v1214 = vsub.s32 1, %v1213
      %v1215 = vrot.slane %v1207, %v1214
      %vm1216 = vcmp.eq.s32.totalorder %v1211, 1
      %vm1217 = vcmp.eq.s32.totalorder %v1215, 1
      %v1218 = vsel %vm1216, %v1203, 0.0
      %v1219 = vsel %vm1217, %v1204, 0.0
      %v1222 = vrot.slane %v841, 4
      %v1223 = vrot.slane %v842, 4
      %v1228 = vrot.slane %v885, 4
      %v1229 = vrot.slane %v886, 4
      %v1234 = vrot.slane %v931, 4
      %v1235 = vrot.slane %v932, 4
      %v1240 = vrot.slane %v947, 4
      %v1241 = vrot.slane %v948, 4
      %v1246 = vrot.slane %v977, 4
      %v1247 = vrot.slane %v978, 4
      %v1252 = vrot.slane %v1007, 4
      %v1253 = vrot.slane %v1008, 4
      %v1258 = vrot.slane %v1015, 4
      %v1259 = vrot.slane %v1016, 4
      %v1264 = vrot.slane %v1059, 4
      %v1265 = vrot.slane %v1060, 4
      %v1268 = vsel %vm387, %v819, %v1222
      %v1269 = vsel %vm387, %v820, %v1223
      %v1270 = vsel %vm387, %v863, %v1228
      %v1271 = vsel %vm387, %v864, %v1229
      %v1272 = vsel %vm387, %v909, %v1234
      %v1273 = vsel %vm387, %v910, %v1235
      %v1274 = vsel %vm387, %v939, %v1240
      %v1275 = vsel %vm387, %v940, %v1241
      %v1276 = vsel %vm387, %v955, %v1246
      %v1277 = vsel %vm387, %v956, %v1247
      %v1278 = vsel %vm387, %v999, %v1252
      %v1279 = vsel %vm387, %v1000, %v1253
      %v1280 = vsel %vm387, %v790, %v1258
      %v1281 = vsel %vm387, %v791, %v1259
      %v1282 = vsel %vm387, %v1037, %v1264
      %v1283 = vsel %vm387, %v1038, %v1265
      %v1286 = vrot.slane %v1075, 4
      %v1287 = vrot.slane %v1076, 4
      %v1292 = vrot.slane %v1105, 4
      %v1293 = vrot.slane %v1106, 4
      %v1298 = vrot.slane %v1152, 4
      %v1299 = vrot.slane %v1153, 4
      %v1304 = vrot.slane %v1196, 4
      %v1305 = vrot.slane %v1197, 4
      %v1308 = vsel %vm387, %v1067, %v1286
      %v1309 = vsel %vm387, %v1068, %v1287
      %v1310 = vsel %vm387, %v1083, %v1292
      %v1311 = vsel %vm387, %v1084, %v1293
      %v1312 = vsel %vm387, %v1130, %v1298
      %v1313 = vsel %vm387, %v1131, %v1299
      %v1314 = vsel %vm387, %v1174, %v1304
      %v1315 = vsel %vm387, %v1175, %v1305
      %v1316 = vld [vmem:[%s6] sm:$0xff]
      %v1317 = vld [vmem:[%s7] sm:$0xff]
      %1319 = vset.pattern.permute.xlu0 0
      %1320 = vperm.xlu0 %1319, %v1317
      %v1321 = vpop.permute.xlu0 %1320
      %vm1323 = vcmask 818176
      %v1325 = vsel %vm1323, %v1316, 0
      %v1328 = vsel %vm387, %v1218, 0
      %v1331 = vsel %vm387, %v1219, 0
      %1333 = vmatprep.subr.mxu0 %v1269
      %1334 = vmatpush1.msra.mxu0 %v1268
      %1335 = vmatprep.subr.mxu0 %v1271
      %1336 = vmatpush1.msra.mxu0 %v1270
      %1337 = vmatprep.subr.mxu0 %v1273
      %1338 = vmatpush1.msra.mxu0 %v1272
      %1339 = vmatprep.subr.mxu0 %v1275
      %1340 = vmatpush1.msra.mxu0 %v1274
      %1341 = vmatprep.subr.mxu0 %v1277
      %1342 = vmatpush1.msra.mxu0 %v1276
      %1343 = vmatprep.subr.mxu0 %v1279
      %1344 = vmatpush1.msra.mxu0 %v1278
      %1345 = vmatprep.subr.mxu0 %v1281
      %1346 = vmatpush1.msra.mxu0 %v1280
      %1347 = vmatprep.subr.mxu0 %v1283
      %1348 = vmatpush1.msra.mxu0 %v1282
      %1349 = vmatprep.subr.mxu0 %v1309
      %1350 = vmatpush1.msra.mxu0 %v1308
      %1351 = vmatprep.subr.mxu0 %v1311
      %1352 = vmatpush1.msra.mxu0 %v1310
      %1353 = vmatprep.subr.mxu0 %v1313
      %1354 = vmatpush1.msra.mxu0 %v1312
      %1355 = vmatprep.subr.mxu0 %v1315
      %1356 = vmatpush1.msra.mxu0 %v1314
      %1357 = vmatprep.subr.mxu0 %v1331
      %1358 = vmatpush1.msra.mxu0 %v1328
      %1359 = vmatprep.subr.mxu0 0.0
      %1360 = vmatpush1.msra.mxu0 0.0
      %1361 = vmatprep.subr.mxu0 0.0
      %1362 = vmatpush1.msra.mxu0 0.0
      %1363 = vmatprep.subr.mxu0 0.0
      %1364 = vmatpush1.msra.mxu0 0.0
      %1365 = vmatprep.subr.mxu0 0.0
      %1366 = vmatpush1.msra.mxu0 0.0
      %1367 = vmatprep.subr.mxu0 0.0
      %1368 = vmatpush1.msra.mxu0 0.0
      %1369 = vmatprep.subr.mxu0 0.0
      %1370 = vmatpush1.msra.mxu0 0.0
      %1371 = vmatprep.subr.mxu0 0.0
      %1372 = vmatpush1.msra.mxu0 0.0
      %1373 = vmatprep.subr.mxu0 0.0
      %1374 = vmatpush1.msra.mxu0 0.0
      %1375 = vmatprep.subr.mxu0 0.0
      %1376 = vmatpush1.msra.mxu0 0.0
      %1377 = vmatprep.subr.mxu0 0.0
      %1378 = vmatpush1.msra.mxu0 0.0
      %1379 = vmatprep.subr.mxu0 0.0
      %1380 = vmatpush1.msra.mxu0 0.0
      %1381 = vmatprep.subr.mxu0 0.0
      %1382 = vmatpush1.msra.mxu0 0.0
      %1383 = vmatprep.subr.mxu0 0.0
      %1384 = vmatpush1.msra.mxu0 0.0
      %1385 = vmatprep.subr.mxu0 0.0
      %1386 = vmatpush1.msra.mxu0 0.0
      %1387 = vmatprep.subr.mxu0 0.0
      %1388 = vmatpush1.msra.mxu0 0.0
      %1389 = vmatprep.subr.mxu0 0.0
      %1390 = vmatpush1.msra.mxu0 0.0
      %1391 = vmatprep.subr.mxu0 0.0
      %1392 = vmatpush1.msra.mxu0 0.0
      %1393 = vmatprep.subr.mxu0 0.0
      %1394 = vmatpush1.msra.mxu0 0.0
      %1395 = vmatprep.subr.mxu0 0.0
      %1396 = vmatpush1.msra.mxu0 0.0
      %1397 = vmatprep.mubr.f32.mxu0 0.0
      %1398 = vmatmul.mubr.f32.gmra.mrb[0].mxu0 %v1325
      %v1399 = vpop.f32.mrb[0].mxu0
      %v1400 = vadd.f32 %v1321, %v1399
      %v1401 = vpop.f32.mrb[0].mxu0
      %v1402 = vadd.f32 %v1321, %v1401
      %1403 = vdwg.mxu0
      %v1404 = vmax.f32 %v1400, 0.0
      %v1405 = vmax.f32 %v1402, 0.0
      %1407 = vrot.lane.b32.xlu0 %v363, 17
      %v1408 = vpop.permute.xlu0 %1407
      %1409 = vrot.lane.b32.xlu0 %v379, 17
      %v1410 = vpop.permute.xlu0 %1409
      %v1411 = vsel %vm479, %v1408, %v1410
      %v1412 = vsel %vm479, %v1410, %v1408
      %v1413 = vsel %vm498, %v1412, -inf
      %v1414 = vsel %vm499, %v1411, -inf
      %v1417 = vcombine.low %v1413, %v1414
      %v1419 = vmax.f32 %v363, %v1417
      %1420 = vrot.lane.b32.xlu0 %v363, 16
      %v1421 = vpop.permute.xlu0 %1420
      %1422 = vrot.lane.b32.xlu0 %v379, 16
      %v1423 = vpop.permute.xlu0 %1422
      %v1424 = vsel %vm506, %v1421, %v1423
      %v1425 = vsel %vm506, %v1423, %v1421
      %v1426 = vsel %vm522, %v1425, -inf
      %v1427 = vsel %vm523, %v1424, -inf
      %v1430 = vcombine.low %v1426, %v1427
      %v1432 = vmax.f32 %v1419, %v1430
      %1433 = vrot.lane.b32.xlu0 %v363, 15
      %v1434 = vpop.permute.xlu0 %1433
      %1435 = vrot.lane.b32.xlu0 %v379, 15
      %v1436 = vpop.permute.xlu0 %1435
      %v1437 = vsel %vm530, %v1434, %v1436
      %v1438 = vsel %vm530, %v1436, %v1434
      %v1439 = vsel %vm546, %v1438, -inf
      %v1440 = vsel %vm547, %v1437, -inf
      %v1443 = vcombine.low %v1439, %v1440
      %v1445 = vmax.f32 %v1432, %v1443
      %1446 = vrot.lane.b32.xlu0 %v363, 1
      %v1447 = vpop.permute.xlu0 %1446
      %1448 = vrot.lane.b32.xlu0 %v379, 1
      %v1449 = vpop.permute.xlu0 %1448
      %v1450 = vsel %vm554, %v1447, %v1449
      %v1451 = vsel %vm554, %v1449, %v1447
      %v1452 = vsel %vm571, %v1451, -inf
      %v1453 = vsel %vm572, %v1450, -inf
      %v1456 = vcombine.low %v1452, %v1453
      %v1458 = vmax.f32 %v1445, %v1456
      %1459 = vrot.lane.b32.xlu0 %v363, 127
      %v1460 = vpop.permute.xlu0 %1459
      %1461 = vrot.lane.b32.xlu0 %v379, 127
      %v1462 = vpop.permute.xlu0 %1461
      %v1463 = vsel %vm579, %v1460, %v1462
      %v1464 = vsel %vm579, %v1462, %v1460
      %v1465 = vsel %vm593, %v1463, -inf
      %v1466 = vsel %vm594, %v1464, -inf
      %v1469 = vcombine.low %v1465, %v1466
      %v1471 = vmax.f32 %v1458, %v1469
      %1472 = vrot.lane.b32.xlu0 %v363, 113
      %v1473 = vpop.permute.xlu0 %1472
      %1474 = vrot.lane.b32.xlu0 %v379, 113
      %v1475 = vpop.permute.xlu0 %1474
      %v1476 = vsel %vm601, %v1473, %v1475
      %v1477 = vsel %vm601, %v1475, %v1473
      %v1478 = vsel %vm618, %v1476, -inf
      %v1479 = vsel %vm619, %v1477, -inf
      %v1482 = vcombine.low %v1478, %v1479
      %v1484 = vmax.f32 %v1471, %v1482
      %1485 = vrot.lane.b32.xlu0 %v363, 112
      %v1486 = vpop.permute.xlu0 %1485
      %1487 = vrot.lane.b32.xlu0 %v379, 112
      %v1488 = vpop.permute.xlu0 %1487
      %v1489 = vsel %vm626, %v1486, %v1488
      %v1490 = vsel %vm626, %v1488, %v1486
      %v1491 = vsel %vm640, %v1489, -inf
      %v1492 = vsel %vm641, %v1490, -inf
      %v1495 = vcombine.low %v1491, %v1492
      %v1497 = vmax.f32 %v1484, %v1495
      %1498 = vrot.lane.b32.xlu0 %v363, 111
      %v1499 = vpop.permute.xlu0 %1498
      %1500 = vrot.lane.b32.xlu0 %v379, 111
      %v1501 = vpop.permute.xlu0 %1500
      %v1502 = vsel %vm648, %v1499, %v1501
      %v1503 = vsel %vm648, %v1501, %v1499
      %v1504 = vsel %vm662, %v1502, -inf
      %v1505 = vsel %vm663, %v1503, -inf
      %v1508 = vcombine.low %v1504, %v1505
      %v1510 = vmax.f32 %v1497, %v1508
      %v1511 = vld [vmem:[%s8] sm:$0xff]
      %v1512 = vld [vmem:[%s9] sm:$0xff]
      %1514 = vset.pattern.permute.xlu0 0
      %1515 = vperm.xlu0 %1514, %v1512
      %v1516 = vpop.permute.xlu0 %1515
      %v1519 = vcombine.high %v1510, %v1510
      %v1521 = vsel %vm380, %v1511, 0
      %v1523 = vsel %vm387, %v1510, 0
      %v1525 = vsel %vm387, %v1519, 0
      %1527 = vmatprep.subr.mxu0 %v1525
      %1528 = vmatpush1.msra.mxu0 %v1523
      %1529 = vmatprep.subr.mxu0 0.0
      %1530 = vmatpush1.msra.mxu0 0.0
      %1531 = vmatprep.subr.mxu0 0.0
      %1532 = vmatpush1.msra.mxu0 0.0
      %1533 = vmatprep.subr.mxu0 0.0
      %1534 = vmatpush1.msra.mxu0 0.0
      %1535 = vmatprep.subr.mxu0 0.0
      %1536 = vmatpush1.msra.mxu0 0.0
      %1537 = vmatprep.subr.mxu0 0.0
      %1538 = vmatpush1.msra.mxu0 0.0
      %1539 = vmatprep.subr.mxu0 0.0
      %1540 = vmatpush1.msra.mxu0 0.0
      %1541 = vmatprep.subr.mxu0 0.0
      %1542 = vmatpush1.msra.mxu0 0.0
      %1543 = vmatprep.subr.mxu0 0.0
      %1544 = vmatpush1.msra.mxu0 0.0
      %1545 = vmatprep.subr.mxu0 0.0
      %1546 = vmatpush1.msra.mxu0 0.0
      %1547 = vmatprep.subr.mxu0 0.0
      %1548 = vmatpush1.msra.mxu0 0.0
      %1549 = vmatprep.subr.mxu0 0.0
      %1550 = vmatpush1.msra.mxu0 0.0
      %1551 = vmatprep.subr.mxu0 0.0
      %1552 = vmatpush1.msra.mxu0 0.0
      %1553 = vmatprep.subr.mxu0 0.0
      %1554 = vmatpush1.msra.mxu0 0.0
      %1555 = vmatprep.subr.mxu0 0.0
      %1556 = vmatpush1.msra.mxu0 0.0
      %1557 = vmatprep.subr.mxu0 0.0
      %1558 = vmatpush1.msra.mxu0 0.0
      %1559 = vmatprep.subr.mxu0 0.0
      %1560 = vmatpush1.msra.mxu0 0.0
      %1561 = vmatprep.subr.mxu0 0.0
      %1562 = vmatpush1.msra.mxu0 0.0
      %1563 = vmatprep.subr.mxu0 0.0
      %1564 = vmatpush1.msra.mxu0 0.0
      %1565 = vmatprep.subr.mxu0 0.0
      %1566 = vmatpush1.msra.mxu0 0.0
      %1567 = vmatprep.subr.mxu0 0.0
      %1568 = vmatpush1.msra.mxu0 0.0
      %1569 = vmatprep.subr.mxu0 0.0
      %1570 = vmatpush1.msra.mxu0 0.0
      %1571 = vmatprep.subr.mxu0 0.0
      %1572 = vmatpush1.msra.mxu0 0.0
      %1573 = vmatprep.subr.mxu0 0.0
      %1574 = vmatpush1.msra.mxu0 0.0
      %1575 = vmatprep.subr.mxu0 0.0
      %1576 = vmatpush1.msra.mxu0 0.0
      %1577 = vmatprep.subr.mxu0 0.0
      %1578 = vmatpush1.msra.mxu0 0.0
      %1579 = vmatprep.subr.mxu0 0.0
      %1580 = vmatpush1.msra.mxu0 0.0
      %1581 = vmatprep.subr.mxu0 0.0
      %1582 = vmatpush1.msra.mxu0 0.0
      %1583 = vmatprep.subr.mxu0 0.0
      %1584 = vmatpush1.msra.mxu0 0.0
      %1585 = vmatprep.subr.mxu0 0.0
      %1586 = vmatpush1.msra.mxu0 0.0
      %1587 = vmatprep.subr.mxu0 0.0
      %1588 = vmatpush1.msra.mxu0 0.0
      %1589 = vmatprep.subr.mxu0 0.0
      %1590 = vmatpush1.msra.mxu0 0.0
      %1591 = vmatprep.mubr.f32.mxu0 0.0
      %1592 = vmatmul.mubr.f32.gmra.mrb[0].mxu0 %v1521
      %v1593 = vpop.f32.mrb[0].mxu0
      %v1594 = vadd.f32 %v1516, %v1593
      %v1595 = vpop.f32.mrb[0].mxu0
      %v1596 = vadd.f32 %v1516, %v1595
      %1597 = vdwg.mxu0
      %v1598 = vmax.f32 %v1594, 0.0
      %v1599 = vmax.f32 %v1596, 0.0
      %1600 = vst [vmem:[%s359] sm:$0xff] %v469
      %1601 = vst [vmem:[%s359 + $0x8] sm:$0xff] %v470
      %1602 = vst [vmem:[%s359 + $0x10] sm:$0xff] %v786
      %1603 = vst [vmem:[%s359 + $0x18] sm:$0xff] %v787
      %1604 = vst [vmem:[%s359 + $0x20] sm:$0xff] %v1404
      %1605 = vst [vmem:[%s359 + $0x28] sm:$0xff] %v1405
      %1606 = vst [vmem:[%s359 + $0x30] sm:$0xff] %v1598
      %1607 = vst [vmem:[%s359 + $0x38] sm:$0xff] %v1599
      %p1608 = scmp.lt.s32.totalorder %s21, 1
      %s1609 = scalar_select %p1608, %s21, 1
      %s1610 = smul.addr %s1609, 8
      %s1611 = smul.addr %s1610, 8
      %s1612 = scalar_lea.vmem %s10, %s1611
      // Predicated region
      $region61: #{inception_forward.1} parent=59 // pred_check
        %p1613 = pneg %p254
      $region62: #{inception_forward.1} parent=59 // pred_check_branch
        %1615 = sbr.rel (%p1613) target = $region64
      $region63: #{inception_forward.1} parent=59 // pred_region
        _
      $region64: #{inception_forward.1} parent=59 // pred_fallthru
        _
    $region60: #{inception_forward.1} parent=5 // pred_fallthru
      _
    %p1616 = scmp.le.s32.totalorder 2, %s16
    // Predicated region
    $region65: #{inception_forward.1} parent=5 // pred_check
      %p1617 = pneg %p1616
    $region66: #{inception_forward.1} parent=5 // pred_check_branch
      %1619 = sbr.rel (%p1617) target = $region68
    $region67: #{inception_forward.1} parent=5 // pred_region
      %s1620 = ssub.s32 %s16, 2
      // Predicated region
      $region69: #{inception_forward.1} parent=67 // pred_check
        %p1621 = pneg %p260
      $region70: #{inception_forward.1} parent=67 // pred_check_branch
        %1623 = sbr.rel (%p1621) target = $region72
      $region71: #{inception_forward.1} parent=67 // pred_region
        %p1624 = scmp.lt.s32.totalorder %s22, 1
        %s1625 = scalar_select %p1624, %s22, 1
        %s1626 = smul.addr %s1625, 8
        %s1627 = smul.addr %s1626, 8
        %s1628 = scalar_lea.vmem %s10, %s1627
      $region72: #{inception_forward.1} parent=67 // pred_fallthru
        _
    $region68: #{inception_forward.1} parent=5 // pred_fallthru
      _
  $region6: #{inception_forward.1} parent=0 // loop_footer
    %s20 = sadd.s32 1, %s16
  $region7: #{inception_forward.1} parent=0 // loop_footer_branch
    %15 = sbr.rel target = $region3
  $region8: #{inception_forward.1} parent=0 // loop_exit
    _

</llo_original>
